<compile_context>
chip_gen: v7x
topology: tpu7x:2x2x1
jax: 0.10.0
libtpu: 0.0.40
codegen_flags: <defaults>
</compile_context>

<pallas_src>
import functools

import jax
import jax.numpy as jnp
from jax.experimental import pallas as pl
from jax.experimental.pallas import tpu as pltpu


def _dsconv_kernel(x_ref, dww_ref, dwb_ref, pww_ref, pwb_ref, o_ref,
                   xpad_ref, dwf_ref, *,
                   k, stride, pad, h, w, h_out, w_out, nb, cin, cout):
    """One batch-block per grid step.

    x_ref    : (nb, Cin, H, W)          NCHW input block (unpadded)
    dww_ref  : (k*k, Cin, 1, Wout)      depthwise weights, BN scale folded in,
                                        pre-broadcast along the lane row
    dwb_ref  : (Cin, 1)                 folded depthwise BN bias
    pww_ref  : (Cout, Cin)              pointwise weights, BN scale folded in
    pwb_ref  : (Cout, 1)                folded pointwise BN bias
    o_ref    : (nb, Cout, Hout*Wout)    lane-dense, already channel-major (NCHW)
    xpad_ref : (nb, Cin, H+2p, W+2p)    VMEM scratch: zero-padded input (halo)
    dwf_ref  : (Cin, Hout*Wout)         VMEM scratch: flattened depthwise result
    """
    hw = h_out * w_out

    # Build the zero-padded input in VMEM. Zeroed every step (cheap, a few KB)
    # so the halo is valid no matter how the parallel grid is split over cores.
    xpad_ref[...] = jnp.zeros(xpad_ref.shape, xpad_ref.dtype)
    xpad_ref[:, :, pad:pad + h, pad:pad + w] = x_ref[...]

    # Hoisted parameter loads (constant across the batch-block).
    dwb = dwb_ref[...]          # (Cin, 1)   -> lane broadcast over HW
    pww = pww_ref[...]          # (Cout, Cin)
    pwb = pwb_ref[...]          # (Cout, 1)  -> lane broadcast over HW

    for img in range(nb):
        # ---- depthwise conv: k*k shifted-window FMAs on the VPU, channel-major.
        # Each tap weight is a pre-broadcast lane row (Cin, 1, Wout): the multiply
        # is a plain sublane broadcast, no per-tap scalar splats are re-computed.
        acc = jnp.zeros((cin, h_out, w_out), jnp.float32)
        for di in range(k):
            for dj in range(k):
                if stride == 1:
                    patch = xpad_ref[img, :, di:di + h_out, dj:dj + w_out]
                else:
                    # Strided window read straight from VMEM (ref-level strided
                    # slice is the supported mechanism for stride > 1).
                    patch = xpad_ref[img, :,
                                     pl.ds(di, h_out, stride),
                                     pl.ds(dj, w_out, stride)]
                acc = acc + patch * dww_ref[di * k + dj]

        # ---- flatten (Cin, Hout, Wout) -> (Cin, Hout*Wout) through VMEM.
        # Explicit row stores instead of an in-kernel reshape: guaranteed Mosaic
        # lowering, and everything downstream (BN, pointwise, output stores)
        # becomes lane-dense.
        for r in range(h_out):
            dwf_ref[:, r * w_out:(r + 1) * w_out] = acc[:, r, :]

        # ---- depthwise BN (scale folded into weights; add bias) + ReLU.
        d = jnp.maximum(dwf_ref[...] + dwb, 0.0)          # (Cin, HW)

        # ---- pointwise 1x1 conv over channels.
        if cin >= 16 and cout >= 16:
            # MobileNet-sized channels: single MXU matmul, N = HW lane-dense.
            y = jnp.dot(pww, d, preferred_element_type=jnp.float32)
        else:
            # Tiny channel counts: Cin outer-product FMAs on the VPU keep the
            # work in already-loaded vregs (MXU would be shape-starved).
            y = jnp.zeros((cout, hw), jnp.float32)
            for ci in range(cin):
                y = y + pww[:, ci:ci + 1] * d[ci:ci + 1, :]

        # ---- pointwise BN (bias) + ReLU, lane-dense store (HW multiple of 128).
        o_ref[img] = jnp.maximum(y + pwb, 0.0).astype(o_ref.dtype)


def depth_separable_conv2d(x_nchw, dw_w, dw_scale, dw_bias,
                           pw_w, pw_scale, pw_bias, *, stride=1,
                           batch_block=None):
    """x_nchw: (N, Cin, H, W) float32. Returns (N, Cout, Hout, Wout) (NCHW).

    dw_w : (k, k, Cin)   depthwise weights (== torch weight[c, 0, di, dj])
    pw_w : (Cin, Cout)   pointwise weights (== torch weight[o, c, 0, 0].T)
    *_scale / *_bias : folded inference-mode BatchNorm parameters.
    """
    n, cin, h, w = x_nchw.shape
    k = dw_w.shape[0]
    cout = pw_w.shape[1]
    pad = k // 2
    h_out = (h + 2 * pad - k) // stride + 1
    w_out = (w + 2 * pad - k) // stride + 1
    hw = h_out * w_out
    hp, wp = h + 2 * pad, w + 2 * pad

    # Batch blocking: a grid extent of ~2 keeps both v7x TensorCores busy while
    # amortizing per-grid-step overhead (capped so VMEM/vreg use stays small).
    if batch_block is None:
        batch_block = max(1, min(8, n // 2))
    while n % batch_block:
        batch_block -= 1
    nb = batch_block

    # Input is consumed directly as NCHW -- no transpose / pad passes in HBM.
    x = x_nchw.astype(jnp.float32)

    # Fold BN scale into the conv weights (inference-mode BN) and reshape the
    # (tiny) parameter tensors into kernel-friendly layouts.
    dww = dw_w.astype(jnp.float32) * dw_scale.astype(jnp.float32)[None, None, :]
    dww = dww.reshape(k * k, cin)[:, :, None, None]            # (k*k, Cin, 1, 1)
    dww = jnp.broadcast_to(dww, (k * k, cin, 1, w_out))        # lane-row broadcast
    dwb = dw_bias.astype(jnp.float32).reshape(cin, 1)
    pww = (pw_w.astype(jnp.float32)
           * pw_scale.astype(jnp.float32)[None, :]).T          # (Cout, Cin)
    pwb = pw_bias.astype(jnp.float32).reshape(cout, 1)

    kernel = functools.partial(_dsconv_kernel, k=k, stride=stride, pad=pad,
                               h=h, w=w, h_out=h_out, w_out=w_out,
                               nb=nb, cin=cin, cout=cout)

    out_flat = pl.pallas_call(
        kernel,
        out_shape=jax.ShapeDtypeStruct((n, cout, hw), jnp.float32),
        grid=(n // nb,),
        in_specs=[
            pl.BlockSpec((nb, cin, h, w), lambda i: (i, 0, 0, 0)),          # x (NCHW)
            pl.BlockSpec((k * k, cin, 1, w_out), lambda i: (0, 0, 0, 0)),   # dw weights
            pl.BlockSpec((cin, 1), lambda i: (0, 0)),                       # dw BN bias
            pl.BlockSpec((cout, cin), lambda i: (0, 0)),                    # pw weights
            pl.BlockSpec((cout, 1), lambda i: (0, 0)),                      # pw BN bias
        ],
        out_specs=pl.BlockSpec((nb, cout, hw), lambda i: (i, 0, 0)),
        scratch_shapes=[
            pltpu.VMEM((nb, cin, hp, wp), jnp.float32),   # zero-padded input (halo)
            pltpu.VMEM((cin, hw), jnp.float32),           # flattened depthwise result
        ],
        compiler_params=pltpu.CompilerParams(
            dimension_semantics=("parallel",),
            # Explicit scoped-VMEM budget: safe on v5e/v6e (128 MiB physical) and
            # within v7x's 64 MiB; current blocks use only a tiny fraction of it.
            vmem_limit_bytes=32 * 1024 * 1024),
    )(x, dww, dwb, pww, pwb)

    # Output is already channel-major (NCHW); just un-flatten the spatial axis.
    return out_flat.reshape(n, cout, h_out, w_out)


def _reference(x_nchw, dw_w, dw_scale, dw_bias, pw_w, pw_scale, pw_bias, stride):
    n, cin, h, w = x_nchw.shape
    k = dw_w.shape[0]
    pad = k // 2
    x = jnp.transpose(x_nchw, (0, 2, 3, 1))
    y = jax.lax.conv_general_dilated(
        x, dw_w.reshape(k, k, 1, cin),
        window_strides=(stride, stride), padding=[(pad, pad), (pad, pad)],
        dimension_numbers=("NHWC", "HWIO", "NHWC"), feature_group_count=cin)
    y = jnp.maximum(y * dw_scale + dw_bias, 0.0)
    z = jnp.einsum("nhwc,cd->nhwd", y, pw_w)
    z = jnp.maximum(z * pw_scale + pw_bias, 0.0)
    return jnp.transpose(z, (0, 3, 1, 2))


if __name__ == "__main__":
    # Module config: DepthSeparableConv2d(input_channels=4, output_channels=8,
    #                                     kernel_size=3, stride=1)
    N, CIN, H, W = 2, 4, 16, 16
    COUT, K, STRIDE = 8, 3, 1
    EPS = 1e-5

    key = jax.random.PRNGKey(0)
    ks = jax.random.split(key, 12)

    x = jax.random.normal(ks[0], (N, CIN, H, W), jnp.float32)

    # Conv weights. PyTorch depthwise weight is (Cin, 1, k, k); stored here as
    # (k, k, Cin) with dw_w[di, dj, c] == torch_w[c, 0, di, dj].
    dw_w = 0.5 * jax.random.normal(ks[1], (K, K, CIN), jnp.float32)
    # PyTorch pointwise weight is (Cout, Cin, 1, 1); stored as (Cin, Cout).
    pw_w = 0.5 * jax.random.normal(ks[2], (CIN, COUT), jnp.float32)

    # Deterministic BatchNorm parameters (inference mode), folded to scale/bias.
    dw_gamma = 1.0 + 0.1 * jax.random.normal(ks[3], (CIN,), jnp.float32)
    dw_beta = 0.1 * jax.random.normal(ks[4], (CIN,), jnp.float32)
    dw_mean = 0.1 * jax.random.normal(ks[5], (CIN,), jnp.float32)
    dw_var = jnp.abs(jax.random.normal(ks[6], (CIN,), jnp.float32)) + 0.5
    pw_gamma = 1.0 + 0.1 * jax.random.normal(ks[7], (COUT,), jnp.float32)
    pw_beta = 0.1 * jax.random.normal(ks[8], (COUT,), jnp.float32)
    pw_mean = 0.1 * jax.random.normal(ks[9], (COUT,), jnp.float32)
    pw_var = jnp.abs(jax.random.normal(ks[10], (COUT,), jnp.float32)) + 0.5

    dw_scale = dw_gamma / jnp.sqrt(dw_var + EPS)
    dw_bias = dw_beta - dw_mean * dw_scale
    pw_scale = pw_gamma / jnp.sqrt(pw_var + EPS)
    pw_bias = pw_beta - pw_mean * pw_scale

    out = depth_separable_conv2d(x, dw_w, dw_scale, dw_bias,
                                 pw_w, pw_scale, pw_bias, stride=STRIDE)
    out = jax.block_until_ready(out)

    ref = _reference(x, dw_w, dw_scale, dw_bias, pw_w, pw_scale, pw_bias, STRIDE)

    assert out.shape == (N, COUT, H, W), out.shape
    assert jnp.allclose(out, ref, atol=1e-4, rtol=1e-4), \
        float(jnp.max(jnp.abs(out - ref)))
    print("KERNEL_OK")
</pallas_src>

<mosaic_0001>
module attributes {stable_mosaic.version = 11 : i64} {
  func.func @_dsconv_kernel(%arg0: i32, %arg1: memref<1x4x16x16xf32, #tpu.memory_space<vmem>>, %arg2: memref<9x4x1x16xf32, #tpu.memory_space<vmem>>, %arg3: memref<4x1xf32, #tpu.memory_space<vmem>>, %arg4: memref<8x4xf32, #tpu.memory_space<vmem>>, %arg5: memref<8x1xf32, #tpu.memory_space<vmem>>, %arg6: memref<1x8x256xf32, #tpu.memory_space<vmem>>, %arg7: memref<1x4x18x18xf32, #tpu.memory_space<vmem>>, %arg8: memref<4x256xf32, #tpu.memory_space<vmem>>) attributes {dimension_semantics = [#tpu.dimension_semantics<parallel>], iteration_bounds = array<i64: 2>, scalar_prefetch = 0 : i64, scratch_operands = 2 : i64, tpu.core_type = #tpu.core_type<tc>, window_params = [{transform_indices = @transform_0, window_bounds = array<i64: 1, 4, 16, 16>}, {pipeline_mode = #tpu.pipeline_mode<synchronous>, transform_indices = @transform_1, window_bounds = array<i64: 9, 4, 1, 16>}, {pipeline_mode = #tpu.pipeline_mode<synchronous>, transform_indices = @transform_2, window_bounds = array<i64: 4, 1>}, {pipeline_mode = #tpu.pipeline_mode<synchronous>, transform_indices = @transform_3, window_bounds = array<i64: 8, 4>}, {pipeline_mode = #tpu.pipeline_mode<synchronous>, transform_indices = @transform_4, window_bounds = array<i64: 8, 1>}, {transform_indices = @transform_5, window_bounds = array<i64: 1, 8, 256>}]} {
    %cst = arith.constant 0.000000e+00 : f32
    %0 = vector.broadcast %cst : f32 to vector<1x4x18x18xf32>
    %c0 = arith.constant 0 : index
    %c0_0 = arith.constant 0 : index
    %c0_1 = arith.constant 0 : index
    %c0_2 = arith.constant 0 : index
    %1 = vector.load %arg7[%c0, %c0_0, %c0_1, %c0_2] : memref<1x4x18x18xf32, #tpu.memory_space<vmem>>, vector<1x4x18x18xf32>
    tpu.vector_store %arg7[%c0, %c0_0, %c0_1, %c0_2], %0 {strides = array<i32>} : memref<1x4x18x18xf32, #tpu.memory_space<vmem>>, vector<1x4x18x18xf32>,
    %c0_3 = arith.constant 0 : index
    %c0_4 = arith.constant 0 : index
    %c0_5 = arith.constant 0 : index
    %c0_6 = arith.constant 0 : index
    %2 = vector.load %arg1[%c0_3, %c0_4, %c0_5, %c0_6] : memref<1x4x16x16xf32, #tpu.memory_space<vmem>>, vector<1x4x16x16xf32>
    %c0_7 = arith.constant 0 : index
    %c0_8 = arith.constant 0 : index
    %c1 = arith.constant 1 : index
    %c1_9 = arith.constant 1 : index
    %3 = vector.load %arg7[%c0_7, %c0_8, %c1, %c1_9] : memref<1x4x18x18xf32, #tpu.memory_space<vmem>>, vector<1x4x16x16xf32>
    tpu.vector_store %arg7[%c0_7, %c0_8, %c1, %c1_9], %2 {strides = array<i32>} : memref<1x4x18x18xf32, #tpu.memory_space<vmem>>, vector<1x4x16x16xf32>,
    %c0_10 = arith.constant 0 : index
    %c0_11 = arith.constant 0 : index
    %4 = vector.load %arg3[%c0_10, %c0_11] : memref<4x1xf32, #tpu.memory_space<vmem>>, vector<4x1xf32>
    %c0_12 = arith.constant 0 : index
    %c0_13 = arith.constant 0 : index
    %5 = vector.load %arg4[%c0_12, %c0_13] : memref<8x4xf32, #tpu.memory_space<vmem>>, vector<8x4xf32>
    %c0_14 = arith.constant 0 : index
    %c0_15 = arith.constant 0 : index
    %6 = vector.load %arg5[%c0_14, %c0_15] : memref<8x1xf32, #tpu.memory_space<vmem>>, vector<8x1xf32>
    %cst_16 = arith.constant 0.000000e+00 : f32
    %7 = vector.broadcast %cst_16 : f32 to vector<4x16x16xf32>
    %c0_17 = arith.constant 0 : index
    %c0_18 = arith.constant 0 : index
    %c0_19 = arith.constant 0 : index
    %c0_20 = arith.constant 0 : index
    %8 = vector.load %arg7[%c0_17, %c0_18, %c0_19, %c0_20] : memref<1x4x18x18xf32, #tpu.memory_space<vmem>>, vector<1x4x16x16xf32>
    %9 = vector.shape_cast %8 : vector<1x4x16x16xf32> to vector<4x16x16xf32>
    %c0_21 = arith.constant 0 : index
    %c0_22 = arith.constant 0 : index
    %c0_23 = arith.constant 0 : index
    %c0_24 = arith.constant 0 : index
    %10 = vector.load %arg2[%c0_21, %c0_22, %c0_23, %c0_24] : memref<9x4x1x16xf32, #tpu.memory_space<vmem>>, vector<1x4x1x16xf32>
    %11 = vector.shape_cast %10 : vector<1x4x1x16xf32> to vector<4x1x16xf32>
    %12 = vector.broadcast %11 : vector<4x1x16xf32> to vector<4x16x16xf32>
    %13 = arith.mulf %9, %12 : vector<4x16x16xf32>
    %14 = arith.addf %7, %13 : vector<4x16x16xf32>
    %c0_25 = arith.constant 0 : index
    %c0_26 = arith.constant 0 : index
    %c0_27 = arith.constant 0 : index
    %c1_28 = arith.constant 1 : index
    %15 = vector.load %arg7[%c0_25, %c0_26, %c0_27, %c1_28] : memref<1x4x18x18xf32, #tpu.memory_space<vmem>>, vector<1x4x16x16xf32>
    %16 = vector.shape_cast %15 : vector<1x4x16x16xf32> to vector<4x16x16xf32>
    %c1_29 = arith.constant 1 : index
    %c0_30 = arith.constant 0 : index
    %c0_31 = arith.constant 0 : index
    %c0_32 = arith.constant 0 : index
    %17 = vector.load %arg2[%c1_29, %c0_30, %c0_31, %c0_32] : memref<9x4x1x16xf32, #tpu.memory_space<vmem>>, vector<1x4x1x16xf32>
    %18 = vector.shape_cast %17 : vector<1x4x1x16xf32> to vector<4x1x16xf32>
    %19 = vector.broadcast %18 : vector<4x1x16xf32> to vector<4x16x16xf32>
    %20 = arith.mulf %16, %19 : vector<4x16x16xf32>
    %21 = arith.addf %14, %20 : vector<4x16x16xf32>
    %c0_33 = arith.constant 0 : index
    %c0_34 = arith.constant 0 : index
    %c0_35 = arith.constant 0 : index
    %c2 = arith.constant 2 : index
    %22 = vector.load %arg7[%c0_33, %c0_34, %c0_35, %c2] : memref<1x4x18x18xf32, #tpu.memory_space<vmem>>, vector<1x4x16x16xf32>
    %23 = vector.shape_cast %22 : vector<1x4x16x16xf32> to vector<4x16x16xf32>
    %c2_36 = arith.constant 2 : index
    %c0_37 = arith.constant 0 : index
    %c0_38 = arith.constant 0 : index
    %c0_39 = arith.constant 0 : index
    %24 = vector.load %arg2[%c2_36, %c0_37, %c0_38, %c0_39] : memref<9x4x1x16xf32, #tpu.memory_space<vmem>>, vector<1x4x1x16xf32>
    %25 = vector.shape_cast %24 : vector<1x4x1x16xf32> to vector<4x1x16xf32>
    %26 = vector.broadcast %25 : vector<4x1x16xf32> to vector<4x16x16xf32>
    %27 = arith.mulf %23, %26 : vector<4x16x16xf32>
    %28 = arith.addf %21, %27 : vector<4x16x16xf32>
    %c0_40 = arith.constant 0 : index
    %c0_41 = arith.constant 0 : index
    %c1_42 = arith.constant 1 : index
    %c0_43 = arith.constant 0 : index
    %29 = vector.load %arg7[%c0_40, %c0_41, %c1_42, %c0_43] : memref<1x4x18x18xf32, #tpu.memory_space<vmem>>, vector<1x4x16x16xf32>
    %30 = vector.shape_cast %29 : vector<1x4x16x16xf32> to vector<4x16x16xf32>
    %c3 = arith.constant 3 : index
    %c0_44 = arith.constant 0 : index
    %c0_45 = arith.constant 0 : index
    %c0_46 = arith.constant 0 : index
    %31 = vector.load %arg2[%c3, %c0_44, %c0_45, %c0_46] : memref<9x4x1x16xf32, #tpu.memory_space<vmem>>, vector<1x4x1x16xf32>
    %32 = vector.shape_cast %31 : vector<1x4x1x16xf32> to vector<4x1x16xf32>
    %33 = vector.broadcast %32 : vector<4x1x16xf32> to vector<4x16x16xf32>
    %34 = arith.mulf %30, %33 : vector<4x16x16xf32>
    %35 = arith.addf %28, %34 : vector<4x16x16xf32>
    %c0_47 = arith.constant 0 : index
    %c0_48 = arith.constant 0 : index
    %c1_49 = arith.constant 1 : index
    %c1_50 = arith.constant 1 : index
    %36 = vector.load %arg7[%c0_47, %c0_48, %c1_49, %c1_50] : memref<1x4x18x18xf32, #tpu.memory_space<vmem>>, vector<1x4x16x16xf32>
    %37 = vector.shape_cast %36 : vector<1x4x16x16xf32> to vector<4x16x16xf32>
    %c4 = arith.constant 4 : index
    %c0_51 = arith.constant 0 : index
    %c0_52 = arith.constant 0 : index
    %c0_53 = arith.constant 0 : index
    %38 = vector.load %arg2[%c4, %c0_51, %c0_52, %c0_53] : memref<9x4x1x16xf32, #tpu.memory_space<vmem>>, vector<1x4x1x16xf32>
    %39 = vector.shape_cast %38 : vector<1x4x1x16xf32> to vector<4x1x16xf32>
    %40 = vector.broadcast %39 : vector<4x1x16xf32> to vector<4x16x16xf32>
    %41 = arith.mulf %37, %40 : vector<4x16x16xf32>
    %42 = arith.addf %35, %41 : vector<4x16x16xf32>
    %c0_54 = arith.constant 0 : index
    %c0_55 = arith.constant 0 : index
    %c1_56 = arith.constant 1 : index
    %c2_57 = arith.constant 2 : index
    %43 = vector.load %arg7[%c0_54, %c0_55, %c1_56, %c2_57] : memref<1x4x18x18xf32, #tpu.memory_space<vmem>>, vector<1x4x16x16xf32>
    %44 = vector.shape_cast %43 : vector<1x4x16x16xf32> to vector<4x16x16xf32>
    %c5 = arith.constant 5 : index
    %c0_58 = arith.constant 0 : index
    %c0_59 = arith.constant 0 : index
    %c0_60 = arith.constant 0 : index
    %45 = vector.load %arg2[%c5, %c0_58, %c0_59, %c0_60] : memref<9x4x1x16xf32, #tpu.memory_space<vmem>>, vector<1x4x1x16xf32>
    %46 = vector.shape_cast %45 : vector<1x4x1x16xf32> to vector<4x1x16xf32>
    %47 = vector.broadcast %46 : vector<4x1x16xf32> to vector<4x16x16xf32>
    %48 = arith.mulf %44, %47 : vector<4x16x16xf32>
    %49 = arith.addf %42, %48 : vector<4x16x16xf32>
    %c0_61 = arith.constant 0 : index
    %c0_62 = arith.constant 0 : index
    %c2_63 = arith.constant 2 : index
    %c0_64 = arith.constant 0 : index
    %50 = vector.load %arg7[%c0_61, %c0_62, %c2_63, %c0_64] : memref<1x4x18x18xf32, #tpu.memory_space<vmem>>, vector<1x4x16x16xf32>
    %51 = vector.shape_cast %50 : vector<1x4x16x16xf32> to vector<4x16x16xf32>
    %c6 = arith.constant 6 : index
    %c0_65 = arith.constant 0 : index
    %c0_66 = arith.constant 0 : index
    %c0_67 = arith.constant 0 : index
    %52 = vector.load %arg2[%c6, %c0_65, %c0_66, %c0_67] : memref<9x4x1x16xf32, #tpu.memory_space<vmem>>, vector<1x4x1x16xf32>
    %53 = vector.shape_cast %52 : vector<1x4x1x16xf32> to vector<4x1x16xf32>
    %54 = vector.broadcast %53 : vector<4x1x16xf32> to vector<4x16x16xf32>
    %55 = arith.mulf %51, %54 : vector<4x16x16xf32>
    %56 = arith.addf %49, %55 : vector<4x16x16xf32>
    %c0_68 = arith.constant 0 : index
    %c0_69 = arith.constant 0 : index
    %c2_70 = arith.constant 2 : index
    %c1_71 = arith.constant 1 : index
    %57 = vector.load %arg7[%c0_68, %c0_69, %c2_70, %c1_71] : memref<1x4x18x18xf32, #tpu.memory_space<vmem>>, vector<1x4x16x16xf32>
    %58 = vector.shape_cast %57 : vector<1x4x16x16xf32> to vector<4x16x16xf32>
    %c7 = arith.constant 7 : index
    %c0_72 = arith.constant 0 : index
    %c0_73 = arith.constant 0 : index
    %c0_74 = arith.constant 0 : index
    %59 = vector.load %arg2[%c7, %c0_72, %c0_73, %c0_74] : memref<9x4x1x16xf32, #tpu.memory_space<vmem>>, vector<1x4x1x16xf32>
    %60 = vector.shape_cast %59 : vector<1x4x1x16xf32> to vector<4x1x16xf32>
    %61 = vector.broadcast %60 : vector<4x1x16xf32> to vector<4x16x16xf32>
    %62 = arith.mulf %58, %61 : vector<4x16x16xf32>
    %63 = arith.addf %56, %62 : vector<4x16x16xf32>
    %c0_75 = arith.constant 0 : index
    %c0_76 = arith.constant 0 : index
    %c2_77 = arith.constant 2 : index
    %c2_78 = arith.constant 2 : index
    %64 = vector.load %arg7[%c0_75, %c0_76, %c2_77, %c2_78] : memref<1x4x18x18xf32, #tpu.memory_space<vmem>>, vector<1x4x16x16xf32>
    %65 = vector.shape_cast %64 : vector<1x4x16x16xf32> to vector<4x16x16xf32>
    %c8 = arith.constant 8 : index
    %c0_79 = arith.constant 0 : index
    %c0_80 = arith.constant 0 : index
    %c0_81 = arith.constant 0 : index
    %66 = vector.load %arg2[%c8, %c0_79, %c0_80, %c0_81] : memref<9x4x1x16xf32, #tpu.memory_space<vmem>>, vector<1x4x1x16xf32>
    %67 = vector.shape_cast %66 : vector<1x4x1x16xf32> to vector<4x1x16xf32>
    %68 = vector.broadcast %67 : vector<4x1x16xf32> to vector<4x16x16xf32>
    %69 = arith.mulf %65, %68 : vector<4x16x16xf32>
    %70 = arith.addf %63, %69 : vector<4x16x16xf32>
    %71 = vector.extract_strided_slice %70 {offsets = [0, 0, 0], sizes = [4, 1, 16], strides = [1, 1, 1]} : vector<4x16x16xf32> to vector<4x1x16xf32>
    %72 = vector.shape_cast %71 : vector<4x1x16xf32> to vector<4x16xf32>
    %c0_82 = arith.constant 0 : index
    %c0_83 = arith.constant 0 : index
    %73 = vector.load %arg8[%c0_82, %c0_83] : memref<4x256xf32, #tpu.memory_space<vmem>>, vector<4x16xf32>
    tpu.vector_store %arg8[%c0_82, %c0_83], %72 {strides = array<i32>} : memref<4x256xf32, #tpu.memory_space<vmem>>, vector<4x16xf32>,
    %74 = vector.extract_strided_slice %70 {offsets = [0, 1, 0], sizes = [4, 1, 16], strides = [1, 1, 1]} : vector<4x16x16xf32> to vector<4x1x16xf32>
    %75 = vector.shape_cast %74 : vector<4x1x16xf32> to vector<4x16xf32>
    %c0_84 = arith.constant 0 : index
    %c16 = arith.constant 16 : index
    %76 = vector.load %arg8[%c0_84, %c16] : memref<4x256xf32, #tpu.memory_space<vmem>>, vector<4x16xf32>
    tpu.vector_store %arg8[%c0_84, %c16], %75 {strides = array<i32>} : memref<4x256xf32, #tpu.memory_space<vmem>>, vector<4x16xf32>,
    %77 = vector.extract_strided_slice %70 {offsets = [0, 2, 0], sizes = [4, 1, 16], strides = [1, 1, 1]} : vector<4x16x16xf32> to vector<4x1x16xf32>
    %78 = vector.shape_cast %77 : vector<4x1x16xf32> to vector<4x16xf32>
    %c0_85 = arith.constant 0 : index
    %c32 = arith.constant 32 : index
    %79 = vector.load %arg8[%c0_85, %c32] : memref<4x256xf32, #tpu.memory_space<vmem>>, vector<4x16xf32>
    tpu.vector_store %arg8[%c0_85, %c32], %78 {strides = array<i32>} : memref<4x256xf32, #tpu.memory_space<vmem>>, vector<4x16xf32>,
    %80 = vector.extract_strided_slice %70 {offsets = [0, 3, 0], sizes = [4, 1, 16], strides = [1, 1, 1]} : vector<4x16x16xf32> to vector<4x1x16xf32>
    %81 = vector.shape_cast %80 : vector<4x1x16xf32> to vector<4x16xf32>
    %c0_86 = arith.constant 0 : index
    %c48 = arith.constant 48 : index
    %82 = vector.load %arg8[%c0_86, %c48] : memref<4x256xf32, #tpu.memory_space<vmem>>, vector<4x16xf32>
    tpu.vector_store %arg8[%c0_86, %c48], %81 {strides = array<i32>} : memref<4x256xf32, #tpu.memory_space<vmem>>, vector<4x16xf32>,
    %83 = vector.extract_strided_slice %70 {offsets = [0, 4, 0], sizes = [4, 1, 16], strides = [1, 1, 1]} : vector<4x16x16xf32> to vector<4x1x16xf32>
    %84 = vector.shape_cast %83 : vector<4x1x16xf32> to vector<4x16xf32>
    %c0_87 = arith.constant 0 : index
    %c64 = arith.constant 64 : index
    %85 = vector.load %arg8[%c0_87, %c64] : memref<4x256xf32, #tpu.memory_space<vmem>>, vector<4x16xf32>
    tpu.vector_store %arg8[%c0_87, %c64], %84 {strides = array<i32>} : memref<4x256xf32, #tpu.memory_space<vmem>>, vector<4x16xf32>,
    %86 = vector.extract_strided_slice %70 {offsets = [0, 5, 0], sizes = [4, 1, 16], strides = [1, 1, 1]} : vector<4x16x16xf32> to vector<4x1x16xf32>
    %87 = vector.shape_cast %86 : vector<4x1x16xf32> to vector<4x16xf32>
    %c0_88 = arith.constant 0 : index
    %c80 = arith.constant 80 : index
    %88 = vector.load %arg8[%c0_88, %c80] : memref<4x256xf32, #tpu.memory_space<vmem>>, vector<4x16xf32>
    tpu.vector_store %arg8[%c0_88, %c80], %87 {strides = array<i32>} : memref<4x256xf32, #tpu.memory_space<vmem>>, vector<4x16xf32>,
    %89 = vector.extract_strided_slice %70 {offsets = [0, 6, 0], sizes = [4, 1, 16], strides = [1, 1, 1]} : vector<4x16x16xf32> to vector<4x1x16xf32>
    %90 = vector.shape_cast %89 : vector<4x1x16xf32> to vector<4x16xf32>
    %c0_89 = arith.constant 0 : index
    %c96 = arith.constant 96 : index
    %91 = vector.load %arg8[%c0_89, %c96] : memref<4x256xf32, #tpu.memory_space<vmem>>, vector<4x16xf32>
    tpu.vector_store %arg8[%c0_89, %c96], %90 {strides = array<i32>} : memref<4x256xf32, #tpu.memory_space<vmem>>, vector<4x16xf32>,
    %92 = vector.extract_strided_slice %70 {offsets = [0, 7, 0], sizes = [4, 1, 16], strides = [1, 1, 1]} : vector<4x16x16xf32> to vector<4x1x16xf32>
    %93 = vector.shape_cast %92 : vector<4x1x16xf32> to vector<4x16xf32>
    %c0_90 = arith.constant 0 : index
    %c112 = arith.constant 112 : index
    %94 = vector.load %arg8[%c0_90, %c112] : memref<4x256xf32, #tpu.memory_space<vmem>>, vector<4x16xf32>
    tpu.vector_store %arg8[%c0_90, %c112], %93 {strides = array<i32>} : memref<4x256xf32, #tpu.memory_space<vmem>>, vector<4x16xf32>,
    %95 = vector.extract_strided_slice %70 {offsets = [0, 8, 0], sizes = [4, 1, 16], strides = [1, 1, 1]} : vector<4x16x16xf32> to vector<4x1x16xf32>
    %96 = vector.shape_cast %95 : vector<4x1x16xf32> to vector<4x16xf32>
    %c0_91 = arith.constant 0 : index
    %c128 = arith.constant 128 : index
    %97 = vector.load %arg8[%c0_91, %c128] : memref<4x256xf32, #tpu.memory_space<vmem>>, vector<4x16xf32>
    tpu.vector_store %arg8[%c0_91, %c128], %96 {strides = array<i32>} : memref<4x256xf32, #tpu.memory_space<vmem>>, vector<4x16xf32>,
    %98 = vector.extract_strided_slice %70 {offsets = [0, 9, 0], sizes = [4, 1, 16], strides = [1, 1, 1]} : vector<4x16x16xf32> to vector<4x1x16xf32>
    %99 = vector.shape_cast %98 : vector<4x1x16xf32> to vector<4x16xf32>
    %c0_92 = arith.constant 0 : index
    %c144 = arith.constant 144 : index
    %100 = vector.load %arg8[%c0_92, %c144] : memref<4x256xf32, #tpu.memory_space<vmem>>, vector<4x16xf32>
    tpu.vector_store %arg8[%c0_92, %c144], %99 {strides = array<i32>} : memref<4x256xf32, #tpu.memory_space<vmem>>, vector<4x16xf32>,
    %101 = vector.extract_strided_slice %70 {offsets = [0, 10, 0], sizes = [4, 1, 16], strides = [1, 1, 1]} : vector<4x16x16xf32> to vector<4x1x16xf32>
    %102 = vector.shape_cast %101 : vector<4x1x16xf32> to vector<4x16xf32>
    %c0_93 = arith.constant 0 : index
    %c160 = arith.constant 160 : index
    %103 = vector.load %arg8[%c0_93, %c160] : memref<4x256xf32, #tpu.memory_space<vmem>>, vector<4x16xf32>
    tpu.vector_store %arg8[%c0_93, %c160], %102 {strides = array<i32>} : memref<4x256xf32, #tpu.memory_space<vmem>>, vector<4x16xf32>,
    %104 = vector.extract_strided_slice %70 {offsets = [0, 11, 0], sizes = [4, 1, 16], strides = [1, 1, 1]} : vector<4x16x16xf32> to vector<4x1x16xf32>
    %105 = vector.shape_cast %104 : vector<4x1x16xf32> to vector<4x16xf32>
    %c0_94 = arith.constant 0 : index
    %c176 = arith.constant 176 : index
    %106 = vector.load %arg8[%c0_94, %c176] : memref<4x256xf32, #tpu.memory_space<vmem>>, vector<4x16xf32>
    tpu.vector_store %arg8[%c0_94, %c176], %105 {strides = array<i32>} : memref<4x256xf32, #tpu.memory_space<vmem>>, vector<4x16xf32>,
    %107 = vector.extract_strided_slice %70 {offsets = [0, 12, 0], sizes = [4, 1, 16], strides = [1, 1, 1]} : vector<4x16x16xf32> to vector<4x1x16xf32>
    %108 = vector.shape_cast %107 : vector<4x1x16xf32> to vector<4x16xf32>
    %c0_95 = arith.constant 0 : index
    %c192 = arith.constant 192 : index
    %109 = vector.load %arg8[%c0_95, %c192] : memref<4x256xf32, #tpu.memory_space<vmem>>, vector<4x16xf32>
    tpu.vector_store %arg8[%c0_95, %c192], %108 {strides = array<i32>} : memref<4x256xf32, #tpu.memory_space<vmem>>, vector<4x16xf32>,
    %110 = vector.extract_strided_slice %70 {offsets = [0, 13, 0], sizes = [4, 1, 16], strides = [1, 1, 1]} : vector<4x16x16xf32> to vector<4x1x16xf32>
    %111 = vector.shape_cast %110 : vector<4x1x16xf32> to vector<4x16xf32>
    %c0_96 = arith.constant 0 : index
    %c208 = arith.constant 208 : index
    %112 = vector.load %arg8[%c0_96, %c208] : memref<4x256xf32, #tpu.memory_space<vmem>>, vector<4x16xf32>
    tpu.vector_store %arg8[%c0_96, %c208], %111 {strides = array<i32>} : memref<4x256xf32, #tpu.memory_space<vmem>>, vector<4x16xf32>,
    %113 = vector.extract_strided_slice %70 {offsets = [0, 14, 0], sizes = [4, 1, 16], strides = [1, 1, 1]} : vector<4x16x16xf32> to vector<4x1x16xf32>
    %114 = vector.shape_cast %113 : vector<4x1x16xf32> to vector<4x16xf32>
    %c0_97 = arith.constant 0 : index
    %c224 = arith.constant 224 : index
    %115 = vector.load %arg8[%c0_97, %c224] : memref<4x256xf32, #tpu.memory_space<vmem>>, vector<4x16xf32>
    tpu.vector_store %arg8[%c0_97, %c224], %114 {strides = array<i32>} : memref<4x256xf32, #tpu.memory_space<vmem>>, vector<4x16xf32>,
    %116 = vector.extract_strided_slice %70 {offsets = [0, 15, 0], sizes = [4, 1, 16], strides = [1, 1, 1]} : vector<4x16x16xf32> to vector<4x1x16xf32>
    %117 = vector.shape_cast %116 : vector<4x1x16xf32> to vector<4x16xf32>
    %c0_98 = arith.constant 0 : index
    %c240 = arith.constant 240 : index
    %118 = vector.load %arg8[%c0_98, %c240] : memref<4x256xf32, #tpu.memory_space<vmem>>, vector<4x16xf32>
    tpu.vector_store %arg8[%c0_98, %c240], %117 {strides = array<i32>} : memref<4x256xf32, #tpu.memory_space<vmem>>, vector<4x16xf32>,
    %c0_99 = arith.constant 0 : index
    %c0_100 = arith.constant 0 : index
    %119 = vector.load %arg8[%c0_99, %c0_100] : memref<4x256xf32, #tpu.memory_space<vmem>>, vector<4x256xf32>
    %120 = vector.broadcast %4 : vector<4x1xf32> to vector<4x256xf32>
    %121 = arith.addf %119, %120 : vector<4x256xf32>
    %cst_101 = arith.constant 0.000000e+00 : f32
    %122 = vector.broadcast %cst_101 : f32 to vector<4x256xf32>
    %123 = arith.maximumf %121, %122 : vector<4x256xf32>
    %cst_102 = arith.constant 0.000000e+00 : f32
    %124 = vector.broadcast %cst_102 : f32 to vector<8x256xf32>
    %125 = vector.extract_strided_slice %5 {offsets = [0, 0], sizes = [8, 1], strides = [1, 1]} : vector<8x4xf32> to vector<8x1xf32>
    %126 = vector.extract_strided_slice %123 {offsets = [0, 0], sizes = [1, 256], strides = [1, 1]} : vector<4x256xf32> to vector<1x256xf32>
    %127 = vector.broadcast %125 : vector<8x1xf32> to vector<8x256xf32>
    %128 = vector.broadcast %126 : vector<1x256xf32> to vector<8x256xf32>
    %129 = arith.mulf %127, %128 : vector<8x256xf32>
    %130 = arith.addf %124, %129 : vector<8x256xf32>
    %131 = vector.extract_strided_slice %5 {offsets = [0, 1], sizes = [8, 1], strides = [1, 1]} : vector<8x4xf32> to vector<8x1xf32>
    %132 = vector.extract_strided_slice %123 {offsets = [1, 0], sizes = [1, 256], strides = [1, 1]} : vector<4x256xf32> to vector<1x256xf32>
    %133 = vector.broadcast %131 : vector<8x1xf32> to vector<8x256xf32>
    %134 = vector.broadcast %132 : vector<1x256xf32> to vector<8x256xf32>
    %135 = arith.mulf %133, %134 : vector<8x256xf32>
    %136 = arith.addf %130, %135 : vector<8x256xf32>
    %137 = vector.extract_strided_slice %5 {offsets = [0, 2], sizes = [8, 1], strides = [1, 1]} : vector<8x4xf32> to vector<8x1xf32>
    %138 = vector.extract_strided_slice %123 {offsets = [2, 0], sizes = [1, 256], strides = [1, 1]} : vector<4x256xf32> to vector<1x256xf32>
    %139 = vector.broadcast %137 : vector<8x1xf32> to vector<8x256xf32>
    %140 = vector.broadcast %138 : vector<1x256xf32> to vector<8x256xf32>
    %141 = arith.mulf %139, %140 : vector<8x256xf32>
    %142 = arith.addf %136, %141 : vector<8x256xf32>
    %143 = vector.extract_strided_slice %5 {offsets = [0, 3], sizes = [8, 1], strides = [1, 1]} : vector<8x4xf32> to vector<8x1xf32>
    %144 = vector.extract_strided_slice %123 {offsets = [3, 0], sizes = [1, 256], strides = [1, 1]} : vector<4x256xf32> to vector<1x256xf32>
    %145 = vector.broadcast %143 : vector<8x1xf32> to vector<8x256xf32>
    %146 = vector.broadcast %144 : vector<1x256xf32> to vector<8x256xf32>
    %147 = arith.mulf %145, %146 : vector<8x256xf32>
    %148 = arith.addf %142, %147 : vector<8x256xf32>
    %149 = vector.broadcast %6 : vector<8x1xf32> to vector<8x256xf32>
    %150 = arith.addf %148, %149 : vector<8x256xf32>
    %cst_103 = arith.constant 0.000000e+00 : f32
    %151 = vector.broadcast %cst_103 : f32 to vector<8x256xf32>
    %152 = arith.maximumf %150, %151 : vector<8x256xf32>
    %c0_104 = arith.constant 0 : index
    %c0_105 = arith.constant 0 : index
    %c0_106 = arith.constant 0 : index
    %153 = vector.load %arg6[%c0_104, %c0_105, %c0_106] : memref<1x8x256xf32, #tpu.memory_space<vmem>>, vector<1x8x256xf32>
    %154 = vector.shape_cast %153 : vector<1x8x256xf32> to vector<8x256xf32>
    %155 = vector.shape_cast %152 : vector<8x256xf32> to vector<1x8x256xf32>
    tpu.vector_store %arg6[%c0_104, %c0_105, %c0_106], %155 {strides = array<i32>} : memref<1x8x256xf32, #tpu.memory_space<vmem>>, vector<1x8x256xf32>,
    return
  }
  func.func @transform_0(%arg0: i32) -> (i32, i32, i32, i32) {
    %c0_i32 = arith.constant 0 : i32
    %c0_i32_0 = arith.constant 0 : i32
    %c0_i32_1 = arith.constant 0 : i32
    %c0_i32_2 = arith.constant 0 : i32
    return %arg0, %c0_i32, %c0_i32_0, %c0_i32_1 : i32, i32, i32, i32
  }
  func.func @transform_1(%arg0: i32) -> (i32, i32, i32, i32) {
    %c0_i32 = arith.constant 0 : i32
    %c0_i32_0 = arith.constant 0 : i32
    %c0_i32_1 = arith.constant 0 : i32
    %c0_i32_2 = arith.constant 0 : i32
    %c0_i32_3 = arith.constant 0 : i32
    return %c0_i32, %c0_i32_0, %c0_i32_1, %c0_i32_2 : i32, i32, i32, i32
  }
  func.func @transform_2(%arg0: i32) -> (i32, i32) {
    %c0_i32 = arith.constant 0 : i32
    %c0_i32_0 = arith.constant 0 : i32
    %c0_i32_1 = arith.constant 0 : i32
    return %c0_i32, %c0_i32_0 : i32, i32
  }
  func.func @transform_3(%arg0: i32) -> (i32, i32) {
    %c0_i32 = arith.constant 0 : i32
    %c0_i32_0 = arith.constant 0 : i32
    %c0_i32_1 = arith.constant 0 : i32
    return %c0_i32, %c0_i32_0 : i32, i32
  }
  func.func @transform_4(%arg0: i32) -> (i32, i32) {
    %c0_i32 = arith.constant 0 : i32
    %c0_i32_0 = arith.constant 0 : i32
    %c0_i32_1 = arith.constant 0 : i32
    return %c0_i32, %c0_i32_0 : i32, i32
  }
  func.func @transform_5(%arg0: i32) -> (i32, i32, i32) {
    %c0_i32 = arith.constant 0 : i32
    %c0_i32_0 = arith.constant 0 : i32
    %c0_i32_1 = arith.constant 0 : i32
    return %arg0, %c0_i32, %c0_i32_0 : i32, i32, i32
  }
}

</mosaic_0001>

<llo_original>
// kernel: tpu_custom_call.1
$region0: #{tpu_custom_call.1}
  #allocation0 [shape = 'u32[]', space=smem, size = 0x4, offset = 0x4, fixed_abs, tag = 'smem constant byte address 0x4 - core index']
  #allocation1 [shape = 'u32[144,128]{1,0:T(1,128)}', space=vmem, size = 0x12000, scoped, tag = 'internal scratch']
  #allocation2 [shape = 'f32[1,4,18,18]{3,2,1,0:T(8,128)}', space=vmem, size = 0xc000, scoped, tag = 'scratch operand']
  #allocation3 [shape = 'f32[4,256]{1,0:T(4,128)}', space=vmem, size = 0x1000, scoped, tag = 'scratch operand']
  %s0 = inlined_call_operand.hbm [shape: f32[2,4,16,16], index: 0, kind: input, shape index: {}]
  %s1 = inlined_call_operand.hbm [shape: f32[9,4,1,16], index: 1, kind: input, shape index: {}]
  %s2 = inlined_call_operand.vmem [shape: f32[4,1], index: 2, kind: input, shape index: {}]
  %s3 = inlined_call_operand.vmem [shape: f32[8,4], index: 3, kind: input, shape index: {}]
  %s4 = inlined_call_operand.vmem [shape: f32[8,1], index: 4, kind: input, shape index: {}]
  %s5 = inlined_call_operand.hbm [shape: f32[2,8,256], index: 5, kind: output, shape index: {}]
  %s6 = sld [smem:[#allocation0]]
  $region61: #{tpu_custom_call.1} parent=0
    _
  %s8 = ssub.s32 1, %s6
  %s9 = scalar_select 0, %s8, %s6
  $region1: #{tpu_custom_call.1} parent=0
    #allocation4 [shape = 'u8[65536]{0}', space=vmem, size = 0x10000, scoped, tag = 'input window, operand 0']
    #allocation5 [shape = 's32[2]{0}', space=sflag, size = 0x8, scoped, tag = 'scoped memory for tpu_custom_call.1']
    #allocation6 [shape = 's32[2]{0}', space=sflag, size = 0x8, scoped, tag = 'scoped memory for tpu_custom_call.1']
    #allocation7 [shape = 'u8[18432]{0}', space=vmem, size = 0x4800, scoped, tag = 'input window, operand 1, single buffered']
    #allocation8 [shape = 's32[1]{0}', space=sflag, size = 0x4, scoped, tag = 'scoped memory for tpu_custom_call.1']
    #allocation9 [shape = 'u8[16384]{0}', space=vmem, size = 0x4000, scoped, tag = 'output window, operand 0']
    %10 = vsyncpa [#allocation5], 0
    %s11 = scalar_lea.sflag [#allocation5], 1
    %12 = vsyncpa %s11, 0
    %13 = vsyncpa [#allocation8], 0
    %14 = vsyncpa [#allocation6], 0
    %s15 = scalar_lea.sflag [#allocation6], 1
    %16 = vsyncpa %s15, 0
    loop: start=0, step=1, limit=4
    $region2: #{tpu_custom_call.1} parent=1 // loop_pre_header
      _
    $region3: #{tpu_custom_call.1} parent=1 // loop_header
      %s18 = sphi 0, %s22
      %p19 = scmp.ge.s32.totalorder %s18, 4
      %s28 = sphi 0, %s30
      %s31 = sphi 0, %s28
      %s32 = sphi 0, %s31
      %s48 = sphi 0, %s32
      %s52 = sphi 0, %s52
      %s54 = sphi 0, %s52
      %s55 = sphi 0, %s54
      %s69 = sphi 0, %s55
      %s73 = sphi 0, %s73
      %s75 = sphi 0, %s73
      %s76 = sphi 0, %s75
      %s90 = sphi 0, %s76
      %s94 = sphi 0, %s94
      %s96 = sphi 0, %s94
      %s97 = sphi 0, %s96
      %s111 = sphi 0, %s97
      %s115 = sphi 0, %s115
      %s117 = sphi 0, %s115
      %s118 = sphi 0, %s117
      %s132 = sphi 0, %s118
      %s138 = sphi 0, %s140
      %s141 = sphi 0, %s138
      %s142 = sphi 0, %s141
      %s158 = sphi 0, %s142
    $region4: #{tpu_custom_call.1} parent=1 // loop_header_branch
      %21 = sbr.rel (%p19) target = $region8
    $region5: #{tpu_custom_call.1} parent=1 // loop_body
      %s23 = ssub.s32 %s18, 1
      %s24 = ssub.s32 %s18, 2
      %s25 = sadd.s32 %s18, 1
      %s26 = ssub.s32 %s18, %s25
      %p27 = scmp.eq.s32.totalorder %s26, 0
      %s29 = sadd.s32 %s28, 1
      %s30 = scalar_select %p27, %s28, %s29
      %p33 = pneg %p27
      %p34 = scmp.eq.s32.totalorder %s18, 1
      %p35 = por %p33, %p34
      %p36 = scmp.ne.s32.totalorder %s28, %s31
      %p37 = scmp.eq.s32.totalorder %s18, 0
      %p38 = por %p36, %p37
      %p39 = scmp.ne.s32.totalorder %s28, %s31
      %p40 = scmp.eq.s32.totalorder %s23, 1
      %p41 = por %p39, %p40
      %p42 = scmp.ne.s32.totalorder %s31, %s32
      %p43 = scmp.eq.s32.totalorder %s23, 0
      %p44 = por %p42, %p43
      %p45 = scmp.ne.s32.totalorder %s31, %s32
      %p46 = scmp.eq.s32.totalorder %s24, 1
      %p47 = por %p45, %p46
      %p49 = scmp.ne.s32.totalorder %s32, %s48
      %p50 = scmp.eq.s32.totalorder %s24, 0
      %p51 = por %p49, %p50
      %s53 = sadd.s32 %s52, 1
      %p56 = scmp.eq.s32.totalorder %s18, 1
      %p57 = scmp.ne.s32.totalorder %s52, %s54
      %p58 = scmp.eq.s32.totalorder %s18, 0
      %p59 = por %p57, %p58
      %p60 = scmp.ne.s32.totalorder %s52, %s54
      %p61 = scmp.eq.s32.totalorder %s23, 1
      %p62 = por %p60, %p61
      %p63 = scmp.ne.s32.totalorder %s54, %s55
      %p64 = scmp.eq.s32.totalorder %s23, 0
      %p65 = por %p63, %p64
      %p66 = scmp.ne.s32.totalorder %s54, %s55
      %p67 = scmp.eq.s32.totalorder %s24, 1
      %p68 = por %p66, %p67
      %p70 = scmp.ne.s32.totalorder %s55, %s69
      %p71 = scmp.eq.s32.totalorder %s24, 0
      %p72 = por %p70, %p71
      %s74 = sadd.s32 %s73, 1
      %p77 = scmp.eq.s32.totalorder %s18, 1
      %p78 = scmp.ne.s32.totalorder %s73, %s75
      %p79 = scmp.eq.s32.totalorder %s18, 0
      %p80 = por %p78, %p79
      %p81 = scmp.ne.s32.totalorder %s73, %s75
      %p82 = scmp.eq.s32.totalorder %s23, 1
      %p83 = por %p81, %p82
      %p84 = scmp.ne.s32.totalorder %s75, %s76
      %p85 = scmp.eq.s32.totalorder %s23, 0
      %p86 = por %p84, %p85
      %p87 = scmp.ne.s32.totalorder %s75, %s76
      %p88 = scmp.eq.s32.totalorder %s24, 1
      %p89 = por %p87, %p88
      %p91 = scmp.ne.s32.totalorder %s76, %s90
      %p92 = scmp.eq.s32.totalorder %s24, 0
      %p93 = por %p91, %p92
      %s95 = sadd.s32 %s94, 1
      %p98 = scmp.eq.s32.totalorder %s18, 1
      %p99 = scmp.ne.s32.totalorder %s94, %s96
      %p100 = scmp.eq.s32.totalorder %s18, 0
      %p101 = por %p99, %p100
      %p102 = scmp.ne.s32.totalorder %s94, %s96
      %p103 = scmp.eq.s32.totalorder %s23, 1
      %p104 = por %p102, %p103
      %p105 = scmp.ne.s32.totalorder %s96, %s97
      %p106 = scmp.eq.s32.totalorder %s23, 0
      %p107 = por %p105, %p106
      %p108 = scmp.ne.s32.totalorder %s96, %s97
      %p109 = scmp.eq.s32.totalorder %s24, 1
      %p110 = por %p108, %p109
      %p112 = scmp.ne.s32.totalorder %s97, %s111
      %p113 = scmp.eq.s32.totalorder %s24, 0
      %p114 = por %p112, %p113
      %s116 = sadd.s32 %s115, 1
      %p119 = scmp.eq.s32.totalorder %s18, 1
      %p120 = scmp.ne.s32.totalorder %s115, %s117
      %p121 = scmp.eq.s32.totalorder %s18, 0
      %p122 = por %p120, %p121
      %p123 = scmp.ne.s32.totalorder %s115, %s117
      %p124 = scmp.eq.s32.totalorder %s23, 1
      %p125 = por %p123, %p124
      %p126 = scmp.ne.s32.totalorder %s117, %s118
      %p127 = scmp.eq.s32.totalorder %s23, 0
      %p128 = por %p126, %p127
      %p129 = scmp.ne.s32.totalorder %s117, %s118
      %p130 = scmp.eq.s32.totalorder %s24, 1
      %p131 = por %p129, %p130
      %p133 = scmp.ne.s32.totalorder %s118, %s132
      %p134 = scmp.eq.s32.totalorder %s24, 0
      %p135 = por %p133, %p134
      %s136 = ssub.s32 %s18, %s25
      %p137 = scmp.eq.s32.totalorder %s136, 0
      %s139 = sadd.s32 %s138, 1
      %s140 = scalar_select %p137, %s138, %s139
      %p143 = pneg %p137
      %p144 = scmp.eq.s32.totalorder %s18, 1
      %p145 = por %p143, %p144
      %p146 = scmp.ne.s32.totalorder %s138, %s141
      %p147 = scmp.eq.s32.totalorder %s18, 0
      %p148 = por %p146, %p147
      %p149 = scmp.ne.s32.totalorder %s138, %s141
      %p150 = scmp.eq.s32.totalorder %s23, 1
      %p151 = por %p149, %p150
      %p152 = scmp.ne.s32.totalorder %s141, %s142
      %p153 = scmp.eq.s32.totalorder %s23, 0
      %p154 = por %p152, %p153
      %p155 = scmp.ne.s32.totalorder %s141, %s142
      %p156 = scmp.eq.s32.totalorder %s24, 1
      %p157 = por %p155, %p156
      %p159 = scmp.ne.s32.totalorder %s142, %s158
      %p160 = scmp.eq.s32.totalorder %s24, 0
      %p161 = por %p159, %p160
      %p162 = scmp.le.s32.totalorder 1, %s18
      %p163 = scmp.lt.s32.totalorder %s18, 3
      %p164 = pnand %p162, %p163
      %p165 = pneg %p164
      // Predicated region
      $region9: #{tpu_custom_call.1} parent=5 // pred_check
        _
      $region10: #{tpu_custom_call.1} parent=5 // pred_check_branch
        %167 = sbr.rel (%p164) target = $region12
      $region11: #{tpu_custom_call.1} parent=5 // pred_region
        %s168 = ssub.s32 %s18, 1
        // Predicated region
        $region13: #{tpu_custom_call.1} parent=11 // pred_check
          %p169 = pneg %p65
        $region14: #{tpu_custom_call.1} parent=11 // pred_check_branch
          %171 = sbr.rel (%p169) target = $region16
        $region15: #{tpu_custom_call.1} parent=11 // pred_region
          %s173 = ssub.s32 576, 576
          %174 = vsyncadd [#allocation8], %s173
          %s175 = sshll.u32 [#allocation7], 4
          %s176 = int_to_ptr.vmem [resolvable:$true] %s175
          %181 = dma.hbm_to_vmem [thread:$0]  %s1, 576, %s176, [#allocation8], 16, 16, 1
        $region16: #{tpu_custom_call.1} parent=11 // pred_fallthru
          _
        // Predicated region
        $region17: #{tpu_custom_call.1} parent=11 // pred_check
          %p182 = pneg %p86
        $region18: #{tpu_custom_call.1} parent=11 // pred_check_branch
          %184 = sbr.rel (%p182) target = $region20
        $region19: #{tpu_custom_call.1} parent=11 // pred_region
          _
        $region20: #{tpu_custom_call.1} parent=11 // pred_fallthru
          _
        // Predicated region
        $region21: #{tpu_custom_call.1} parent=11 // pred_check
          %p185 = pneg %p107
        $region22: #{tpu_custom_call.1} parent=11 // pred_check_branch
          %187 = sbr.rel (%p185) target = $region24
        $region23: #{tpu_custom_call.1} parent=11 // pred_region
          _
        $region24: #{tpu_custom_call.1} parent=11 // pred_fallthru
          _
        // Predicated region
        $region25: #{tpu_custom_call.1} parent=11 // pred_check
          %p188 = pneg %p128
        $region26: #{tpu_custom_call.1} parent=11 // pred_check_branch
          %190 = sbr.rel (%p188) target = $region28
        $region27: #{tpu_custom_call.1} parent=11 // pred_region
          _
        $region28: #{tpu_custom_call.1} parent=11 // pred_fallthru
          _
      $region12: #{tpu_custom_call.1} parent=5 // pred_fallthru
        _
      %p191 = scmp.lt.s32.totalorder %s18, 2
      // Predicated region
      $region29: #{tpu_custom_call.1} parent=5 // pred_check
        %p192 = pneg %p191
      $region30: #{tpu_custom_call.1} parent=5 // pred_check_branch
        %194 = sbr.rel (%p192) target = $region32
      $region31: #{tpu_custom_call.1} parent=5 // pred_region
        // Predicated region
        $region33: #{tpu_custom_call.1} parent=31 // pred_check
          %p195 = pneg %p38
        $region34: #{tpu_custom_call.1} parent=31 // pred_check_branch
          %197 = sbr.rel (%p195) target = $region36
        $region35: #{tpu_custom_call.1} parent=31 // pred_region
          %s198 = sand.u32 %s28, 1
          %s199 = scalar_lea.sflag [#allocation5], %s198
          %s200 = sand.u32 %s28, 1
          %s201 = smul.addr %s200, 64
          %s202 = scalar_lea.vmem [#allocation4], %s201
          %s204 = ssub.s32 1024, 1024
          %205 = vsyncadd %s199, %s204
          %s206 = smul.addr %s18, 8
          %s207 = smul.addr %s206, 128
          %s208 = scalar_lea.hbm %s0, %s207
          %s209 = sshll.u32 %s202, 4
          %s210 = int_to_ptr.vmem [resolvable:$true] %s209
          %215 = dma.hbm_to_vmem [thread:$0]  %s208, 1024, %s210, %s199, 128, 128, 8
        $region36: #{tpu_custom_call.1} parent=31 // pred_fallthru
          _
      $region32: #{tpu_custom_call.1} parent=5 // pred_fallthru
        _
      %p216 = scmp.le.s32.totalorder 1, %s18
      %p217 = scmp.lt.s32.totalorder %s18, 3
      %p218 = pnand %p216, %p217
      %p219 = pneg %p218
      // Predicated region
      $region37: #{tpu_custom_call.1} parent=5 // pred_check
        _
      $region38: #{tpu_custom_call.1} parent=5 // pred_check_branch
        %221 = sbr.rel (%p218) target = $region40
      $region39: #{tpu_custom_call.1} parent=5 // pred_region
        %s222 = ssub.s32 %s18, 1
        %s223 = sand.u32 %s31, 1
        %s224 = scalar_lea.sflag [#allocation5], %s223
        %s225 = sand.u32 %s31, 1
        %s226 = smul.addr %s225, 64
        %s227 = scalar_lea.vmem [#allocation4], %s226
        // Predicated region
        $region41: #{tpu_custom_call.1} parent=39 // pred_check
          %p228 = pneg %p44
        $region42: #{tpu_custom_call.1} parent=39 // pred_check_branch
          %230 = sbr.rel (%p228) target = $region44
        $region43: #{tpu_custom_call.1} parent=39 // pred_region
          %231 = dma.done %s224, 1024
        $region44: #{tpu_custom_call.1} parent=39 // pred_fallthru
          _
        // Predicated region
        $region45: #{tpu_custom_call.1} parent=39 // pred_check
          %p232 = pneg %p65
        $region46: #{tpu_custom_call.1} parent=39 // pred_check_branch
          %234 = sbr.rel (%p232) target = $region48
        $region47: #{tpu_custom_call.1} parent=39 // pred_region
          %235 = dma.done [#allocation8], 576
        $region48: #{tpu_custom_call.1} parent=39 // pred_fallthru
          _
        %s236 = sand.u32 %s31, 1
        %s237 = scalar_lea.sflag [#allocation5], %s236
        %s238 = sand.u32 %s31, 1
        %s239 = smul.addr %s238, 64
        %s240 = scalar_lea.vmem [#allocation4], %s239
        %p241 = pneg %p44
        %p242 = pneg %p41
        %p243 = pneg %p65
        %p244 = pneg %p62
        %p245 = pneg %p86
        %p246 = pneg %p83
        %p247 = pneg %p107
        %p248 = pneg %p104
        %p249 = pneg %p128
        %p250 = pneg %p125
        %p251 = pneg %p154
        %p252 = pneg %p151
        %s253 = sand.u32 %s141, 1
        %s254 = scalar_lea.sflag [#allocation6], %s253
        %s255 = sand.u32 %s141, 1
        %s256 = smul.addr %s255, 16
        %s257 = scalar_lea.vmem [#allocation9], %s256
        %vm258 = vcmask 146432
        %259 = vst.msk [vmem:[#allocation2] sm:$0xff] %vm258, 0.0
        %260 = vst.msk [vmem:[#allocation2 + $0x8] sm:$0xff] %vm258, 0.0
        %vm261 = vcmask 140288
        %262 = vst.msk [vmem:[#allocation2 + $0x10] sm:$0x3] %vm261, 0.0
        %263 = vst.msk [vmem:[#allocation2 + $0x18] sm:$0xff] %vm258, 0.0
        %264 = vst.msk [vmem:[#allocation2 + $0x20] sm:$0xff] %vm258, 0.0
        %265 = vst.msk [vmem:[#allocation2 + $0x28] sm:$0x3] %vm261, 0.0
        %266 = vst.msk [vmem:[#allocation2 + $0x30] sm:$0xff] %vm258, 0.0
        %267 = vst.msk [vmem:[#allocation2 + $0x38] sm:$0xff] %vm258, 0.0
        %268 = vst.msk [vmem:[#allocation2 + $0x40] sm:$0x3] %vm261, 0.0
        %269 = vst.msk [vmem:[#allocation2 + $0x48] sm:$0xff] %vm258, 0.0
        %270 = vst.msk [vmem:[#allocation2 + $0x50] sm:$0xff] %vm258, 0.0
        %271 = vst.msk [vmem:[#allocation2 + $0x58] sm:$0x3] %vm261, 0.0
        %v272 = vld [vmem:[%s227] sm:$0xff]
        %v273 = vld [vmem:[%s227 + $0x8] sm:$0xff]
        %v274 = vld [vmem:[%s227 + $0x10] sm:$0xff]
        %v275 = vld [vmem:[%s227 + $0x18] sm:$0xff]
        %v276 = vld [vmem:[%s227 + $0x20] sm:$0xff]
        %v277 = vld [vmem:[%s227 + $0x28] sm:$0xff]
        %v278 = vld [vmem:[%s227 + $0x30] sm:$0xff]
        %v279 = vld [vmem:[%s227 + $0x38] sm:$0xff]
        %288 = vrot.lane.b32.xlu0 %v272, 1
        %v289 = vpop.permute.xlu0 %288
        %290 = vrot.lane.b32.xlu0 %v273, 1
        %v291 = vpop.permute.xlu0 %290
        %292 = vrot.lane.b32.xlu0 %v274, 1
        %v293 = vpop.permute.xlu0 %292
        %294 = vrot.lane.b32.xlu0 %v275, 1
        %v295 = vpop.permute.xlu0 %294
        %296 = vrot.lane.b32.xlu0 %v276, 1
        %v297 = vpop.permute.xlu0 %296
        %298 = vrot.lane.b32.xlu0 %v277, 1
        %v299 = vpop.permute.xlu0 %298
        %300 = vrot.lane.b32.xlu0 %v278, 1
        %v301 = vpop.permute.xlu0 %300
        %302 = vrot.lane.b32.xlu0 %v279, 1
        %v303 = vpop.permute.xlu0 %302
        %vm312 = vcmask 138248
        %313 = vst.msk [vmem:[#allocation2 + $0x1] sm:$0xff] %vm312, %v289
        %314 = vst.msk [vmem:[#allocation2 + $0x9] sm:$0xff] %vm312, %v291
        %315 = vst.msk [vmem:[#allocation2 + $0x19] sm:$0xff] %vm312, %v293
        %316 = vst.msk [vmem:[#allocation2 + $0x21] sm:$0xff] %vm312, %v295
        %317 = vst.msk [vmem:[#allocation2 + $0x31] sm:$0xff] %vm312, %v297
        %318 = vst.msk [vmem:[#allocation2 + $0x39] sm:$0xff] %vm312, %v299
        %319 = vst.msk [vmem:[#allocation2 + $0x49] sm:$0xff] %vm312, %v301
        %320 = vst.msk [vmem:[#allocation2 + $0x51] sm:$0xff] %vm312, %v303
        %v321 = vld [vmem:[%s2] sm:$0xf]
        %v322 = vld [vmem:[%s3] sm:$0xff]
        %v323 = vld [vmem:[%s4] sm:$0xff]
        %v324 = vld [vmem:[#allocation2] sm:$0xff]
        %v325 = vld [vmem:[#allocation2 + $0x8] sm:$0xff]
        %v326 = vld [vmem:[#allocation2 + $0x18] sm:$0xff]
        %v327 = vld [vmem:[#allocation2 + $0x20] sm:$0xff]
        %v328 = vld [vmem:[#allocation2 + $0x30] sm:$0xff]
        %v329 = vld [vmem:[#allocation2 + $0x38] sm:$0xff]
        %v330 = vld [vmem:[#allocation2 + $0x48] sm:$0xff]
        %v331 = vld [vmem:[#allocation2 + $0x50] sm:$0xff]
        %v332 = vld [vmem:[#allocation7] sm:$0x1]
        %v333 = vld [vmem:[#allocation7 + $0x1] sm:$0x1]
        %v334 = vld [vmem:[#allocation7 + $0x2] sm:$0x1]
        %v335 = vld [vmem:[#allocation7 + $0x3] sm:$0x1]
        %v340 = vlaneseq
        %v341 = vshrl.u32 %v340, 7
        %v342 = vsub.s32 0, %v341
        %v343 = vrot.slane %v332, %v342
        %v344 = vlaneseq
        %v345 = vshrl.u32 %v344, 7
        %v346 = vsub.s32 0, %v345
        %v347 = vrot.slane %v333, %v346
        %v348 = vlaneseq
        %v349 = vshrl.u32 %v348, 7
        %v350 = vsub.s32 0, %v349
        %v351 = vrot.slane %v334, %v350
        %v352 = vlaneseq
        %v353 = vshrl.u32 %v352, 7
        %v354 = vsub.s32 0, %v353
        %v355 = vrot.slane %v335, %v354
        %v360 = vmul.f32 %v324, %v343
        %v361 = vmul.f32 %v325, %v343
        %v362 = vmul.f32 %v326, %v347
        %v363 = vmul.f32 %v327, %v347
        %v364 = vmul.f32 %v328, %v351
        %v365 = vmul.f32 %v329, %v351
        %v366 = vmul.f32 %v330, %v355
        %v367 = vmul.f32 %v331, %v355
        %v368 = vadd.f32 %v360, 0.0
        %v369 = vadd.f32 %v361, 0.0
        %v370 = vadd.f32 %v362, 0.0
        %v371 = vadd.f32 %v363, 0.0
        %v372 = vadd.f32 %v364, 0.0
        %v373 = vadd.f32 %v365, 0.0
        %v374 = vadd.f32 %v366, 0.0
        %v375 = vadd.f32 %v367, 0.0
        %s376 = scalar_lea.vmem [#allocation7], 4
        %v377 = vld [vmem:[%s376] sm:$0x1]
        %v378 = vld [vmem:[%s376 + $0x1] sm:$0x1]
        %v379 = vld [vmem:[%s376 + $0x2] sm:$0x1]
        %v380 = vld [vmem:[%s376 + $0x3] sm:$0x1]
        %v385 = vlaneseq
        %v386 = vshrl.u32 %v385, 7
        %v387 = vsub.s32 0, %v386
        %v388 = vrot.slane %v377, %v387
        %v389 = vlaneseq
        %v390 = vshrl.u32 %v389, 7
        %v391 = vsub.s32 0, %v390
        %v392 = vrot.slane %v378, %v391
        %v393 = vlaneseq
        %v394 = vshrl.u32 %v393, 7
        %v395 = vsub.s32 0, %v394
        %v396 = vrot.slane %v379, %v395
        %v397 = vlaneseq
        %v398 = vshrl.u32 %v397, 7
        %v399 = vsub.s32 0, %v398
        %v400 = vrot.slane %v380, %v399
        %401 = vrot.lane.b32.xlu0 %v388, 1
        %v402 = vpop.permute.xlu0 %401
        %403 = vrot.lane.b32.xlu0 %v392, 1
        %v404 = vpop.permute.xlu0 %403
        %405 = vrot.lane.b32.xlu0 %v396, 1
        %v406 = vpop.permute.xlu0 %405
        %407 = vrot.lane.b32.xlu0 %v400, 1
        %v408 = vpop.permute.xlu0 %407
        %v413 = vmul.f32 %v324, %v402
        %v414 = vmul.f32 %v325, %v402
        %v415 = vmul.f32 %v326, %v404
        %v416 = vmul.f32 %v327, %v404
        %v417 = vmul.f32 %v328, %v406
        %v418 = vmul.f32 %v329, %v406
        %v419 = vmul.f32 %v330, %v408
        %v420 = vmul.f32 %v331, %v408
        %429 = vrot.lane.b32.xlu0 %v413, 127
        %v430 = vpop.permute.xlu0 %429
        %431 = vrot.lane.b32.xlu0 %v414, 127
        %v432 = vpop.permute.xlu0 %431
        %433 = vrot.lane.b32.xlu0 %v415, 127
        %v434 = vpop.permute.xlu0 %433
        %435 = vrot.lane.b32.xlu0 %v416, 127
        %v436 = vpop.permute.xlu0 %435
        %437 = vrot.lane.b32.xlu0 %v417, 127
        %v438 = vpop.permute.xlu0 %437
        %439 = vrot.lane.b32.xlu0 %v418, 127
        %v440 = vpop.permute.xlu0 %439
        %441 = vrot.lane.b32.xlu0 %v419, 127
        %v442 = vpop.permute.xlu0 %441
        %443 = vrot.lane.b32.xlu0 %v420, 127
        %v444 = vpop.permute.xlu0 %443
        %v453 = vadd.f32 %v368, %v430
        %v454 = vadd.f32 %v369, %v432
        %v455 = vadd.f32 %v370, %v434
        %v456 = vadd.f32 %v371, %v436
        %v457 = vadd.f32 %v372, %v438
        %v458 = vadd.f32 %v373, %v440
        %v459 = vadd.f32 %v374, %v442
        %v460 = vadd.f32 %v375, %v444
        %s461 = scalar_lea.vmem [#allocation7], 8
        %v462 = vld [vmem:[%s461] sm:$0x1]
        %v463 = vld [vmem:[%s461 + $0x1] sm:$0x1]
        %v464 = vld [vmem:[%s461 + $0x2] sm:$0x1]
        %v465 = vld [vmem:[%s461 + $0x3] sm:$0x1]
        %v470 = vlaneseq
        %v471 = vshrl.u32 %v470, 7
        %v472 = vsub.s32 0, %v471
        %v473 = vrot.slane %v462, %v472
        %v474 = vlaneseq
        %v475 = vshrl.u32 %v474, 7
        %v476 = vsub.s32 0, %v475
        %v477 = vrot.slane %v463, %v476
        %v478 = vlaneseq
        %v479 = vshrl.u32 %v478, 7
        %v480 = vsub.s32 0, %v479
        %v481 = vrot.slane %v464, %v480
        %v482 = vlaneseq
        %v483 = vshrl.u32 %v482, 7
        %v484 = vsub.s32 0, %v483
        %v485 = vrot.slane %v465, %v484
        %486 = vrot.lane.b32.xlu0 %v473, 2
        %v487 = vpop.permute.xlu0 %486
        %488 = vrot.lane.b32.xlu0 %v477, 2
        %v489 = vpop.permute.xlu0 %488
        %490 = vrot.lane.b32.xlu0 %v481, 2
        %v491 = vpop.permute.xlu0 %490
        %492 = vrot.lane.b32.xlu0 %v485, 2
        %v493 = vpop.permute.xlu0 %492
        %v498 = vmul.f32 %v324, %v487
        %v499 = vmul.f32 %v325, %v487
        %v500 = vmul.f32 %v326, %v489
        %v501 = vmul.f32 %v327, %v489
        %v502 = vmul.f32 %v328, %v491
        %v503 = vmul.f32 %v329, %v491
        %v504 = vmul.f32 %v330, %v493
        %v505 = vmul.f32 %v331, %v493
        %514 = vrot.lane.b32.xlu0 %v498, 126
        %v515 = vpop.permute.xlu0 %514
        %516 = vrot.lane.b32.xlu0 %v499, 126
        %v517 = vpop.permute.xlu0 %516
        %518 = vrot.lane.b32.xlu0 %v500, 126
        %v519 = vpop.permute.xlu0 %518
        %520 = vrot.lane.b32.xlu0 %v501, 126
        %v521 = vpop.permute.xlu0 %520
        %522 = vrot.lane.b32.xlu0 %v502, 126
        %v523 = vpop.permute.xlu0 %522
        %524 = vrot.lane.b32.xlu0 %v503, 126
        %v525 = vpop.permute.xlu0 %524
        %526 = vrot.lane.b32.xlu0 %v504, 126
        %v527 = vpop.permute.xlu0 %526
        %528 = vrot.lane.b32.xlu0 %v505, 126
        %v529 = vpop.permute.xlu0 %528
        %v538 = vadd.f32 %v453, %v515
        %v539 = vadd.f32 %v454, %v517
        %v540 = vadd.f32 %v455, %v519
        %v541 = vadd.f32 %v456, %v521
        %v542 = vadd.f32 %v457, %v523
        %v543 = vadd.f32 %v458, %v525
        %v544 = vadd.f32 %v459, %v527
        %v545 = vadd.f32 %v460, %v529
        %v546 = vld [vmem:[#allocation2 + $0x1] sm:$0xff]
        %v547 = vld [vmem:[#allocation2 + $0x9] sm:$0xff]
        %v548 = vld [vmem:[#allocation2 + $0x19] sm:$0xff]
        %v549 = vld [vmem:[#allocation2 + $0x21] sm:$0xff]
        %v550 = vld [vmem:[#allocation2 + $0x31] sm:$0xff]
        %v551 = vld [vmem:[#allocation2 + $0x39] sm:$0xff]
        %v552 = vld [vmem:[#allocation2 + $0x49] sm:$0xff]
        %v553 = vld [vmem:[#allocation2 + $0x51] sm:$0xff]
        %s554 = scalar_lea.vmem [#allocation7], 12
        %v555 = vld [vmem:[%s554] sm:$0x1]
        %v556 = vld [vmem:[%s554 + $0x1] sm:$0x1]
        %v557 = vld [vmem:[%s554 + $0x2] sm:$0x1]
        %v558 = vld [vmem:[%s554 + $0x3] sm:$0x1]
        %v563 = vlaneseq
        %v564 = vshrl.u32 %v563, 7
        %v565 = vsub.s32 0, %v564
        %v566 = vrot.slane %v555, %v565
        %v567 = vlaneseq
        %v568 = vshrl.u32 %v567, 7
        %v569 = vsub.s32 0, %v568
        %v570 = vrot.slane %v556, %v569
        %v571 = vlaneseq
        %v572 = vshrl.u32 %v571, 7
        %v573 = vsub.s32 0, %v572
        %v574 = vrot.slane %v557, %v573
        %v575 = vlaneseq
        %v576 = vshrl.u32 %v575, 7
        %v577 = vsub.s32 0, %v576
        %v578 = vrot.slane %v558, %v577
        %v583 = vmul.f32 %v546, %v566
        %v584 = vmul.f32 %v547, %v566
        %v585 = vmul.f32 %v548, %v570
        %v586 = vmul.f32 %v549, %v570
        %v587 = vmul.f32 %v550, %v574
        %v588 = vmul.f32 %v551, %v574
        %v589 = vmul.f32 %v552, %v578
        %v590 = vmul.f32 %v553, %v578
        %v591 = vadd.f32 %v538, %v583
        %v592 = vadd.f32 %v539, %v584
        %v593 = vadd.f32 %v540, %v585
        %v594 = vadd.f32 %v541, %v586
        %v595 = vadd.f32 %v542, %v587
        %v596 = vadd.f32 %v543, %v588
        %v597 = vadd.f32 %v544, %v589
        %v598 = vadd.f32 %v545, %v590
        %s599 = scalar_lea.vmem [#allocation7], 16
        %v600 = vld [vmem:[%s599] sm:$0x1]
        %v601 = vld [vmem:[%s599 + $0x1] sm:$0x1]
        %v602 = vld [vmem:[%s599 + $0x2] sm:$0x1]
        %v603 = vld [vmem:[%s599 + $0x3] sm:$0x1]
        %v608 = vlaneseq
        %v609 = vshrl.u32 %v608, 7
        %v610 = vsub.s32 0, %v609
        %v611 = vrot.slane %v600, %v610
        %v612 = vlaneseq
        %v613 = vshrl.u32 %v612, 7
        %v614 = vsub.s32 0, %v613
        %v615 = vrot.slane %v601, %v614
        %v616 = vlaneseq
        %v617 = vshrl.u32 %v616, 7
        %v618 = vsub.s32 0, %v617
        %v619 = vrot.slane %v602, %v618
        %v620 = vlaneseq
        %v621 = vshrl.u32 %v620, 7
        %v622 = vsub.s32 0, %v621
        %v623 = vrot.slane %v603, %v622
        %624 = vrot.lane.b32.xlu0 %v611, 1
        %v625 = vpop.permute.xlu0 %624
        %626 = vrot.lane.b32.xlu0 %v615, 1
        %v627 = vpop.permute.xlu0 %626
        %628 = vrot.lane.b32.xlu0 %v619, 1
        %v629 = vpop.permute.xlu0 %628
        %630 = vrot.lane.b32.xlu0 %v623, 1
        %v631 = vpop.permute.xlu0 %630
        %v636 = vmul.f32 %v546, %v625
        %v637 = vmul.f32 %v547, %v625
        %v638 = vmul.f32 %v548, %v627
        %v639 = vmul.f32 %v549, %v627
        %v640 = vmul.f32 %v550, %v629
        %v641 = vmul.f32 %v551, %v629
        %v642 = vmul.f32 %v552, %v631
        %v643 = vmul.f32 %v553, %v631
        %652 = vrot.lane.b32.xlu0 %v636, 127
        %v653 = vpop.permute.xlu0 %652
        %654 = vrot.lane.b32.xlu0 %v637, 127
        %v655 = vpop.permute.xlu0 %654
        %656 = vrot.lane.b32.xlu0 %v638, 127
        %v657 = vpop.permute.xlu0 %656
        %658 = vrot.lane.b32.xlu0 %v639, 127
        %v659 = vpop.permute.xlu0 %658
        %660 = vrot.lane.b32.xlu0 %v640, 127
        %v661 = vpop.permute.xlu0 %660
        %662 = vrot.lane.b32.xlu0 %v641, 127
        %v663 = vpop.permute.xlu0 %662
        %664 = vrot.lane.b32.xlu0 %v642, 127
        %v665 = vpop.permute.xlu0 %664
        %666 = vrot.lane.b32.xlu0 %v643, 127
        %v667 = vpop.permute.xlu0 %666
        %v676 = vadd.f32 %v591, %v653
        %v677 = vadd.f32 %v592, %v655
        %v678 = vadd.f32 %v593, %v657
        %v679 = vadd.f32 %v594, %v659
        %v680 = vadd.f32 %v595, %v661
        %v681 = vadd.f32 %v596, %v663
        %v682 = vadd.f32 %v597, %v665
        %v683 = vadd.f32 %v598, %v667
        %s684 = scalar_lea.vmem [#allocation7], 20
        %v685 = vld [vmem:[%s684] sm:$0x1]
        %v686 = vld [vmem:[%s684 + $0x1] sm:$0x1]
        %v687 = vld [vmem:[%s684 + $0x2] sm:$0x1]
        %v688 = vld [vmem:[%s684 + $0x3] sm:$0x1]
        %v693 = vlaneseq
        %v694 = vshrl.u32 %v693, 7
        %v695 = vsub.s32 0, %v694
        %v696 = vrot.slane %v685, %v695
        %v697 = vlaneseq
        %v698 = vshrl.u32 %v697, 7
        %v699 = vsub.s32 0, %v698
        %v700 = vrot.slane %v686, %v699
        %v701 = vlaneseq
        %v702 = vshrl.u32 %v701, 7
        %v703 = vsub.s32 0, %v702
        %v704 = vrot.slane %v687, %v703
        %v705 = vlaneseq
        %v706 = vshrl.u32 %v705, 7
        %v707 = vsub.s32 0, %v706
        %v708 = vrot.slane %v688, %v707
        %709 = vrot.lane.b32.xlu0 %v696, 2
        %v710 = vpop.permute.xlu0 %709
        %711 = vrot.lane.b32.xlu0 %v700, 2
        %v712 = vpop.permute.xlu0 %711
        %713 = vrot.lane.b32.xlu0 %v704, 2
        %v714 = vpop.permute.xlu0 %713
        %715 = vrot.lane.b32.xlu0 %v708, 2
        %v716 = vpop.permute.xlu0 %715
        %v721 = vmul.f32 %v546, %v710
        %v722 = vmul.f32 %v547, %v710
        %v723 = vmul.f32 %v548, %v712
        %v724 = vmul.f32 %v549, %v712
        %v725 = vmul.f32 %v550, %v714
        %v726 = vmul.f32 %v551, %v714
        %v727 = vmul.f32 %v552, %v716
        %v728 = vmul.f32 %v553, %v716
        %737 = vrot.lane.b32.xlu0 %v721, 126
        %v738 = vpop.permute.xlu0 %737
        %739 = vrot.lane.b32.xlu0 %v722, 126
        %v740 = vpop.permute.xlu0 %739
        %741 = vrot.lane.b32.xlu0 %v723, 126
        %v742 = vpop.permute.xlu0 %741
        %743 = vrot.lane.b32.xlu0 %v724, 126
        %v744 = vpop.permute.xlu0 %743
        %745 = vrot.lane.b32.xlu0 %v725, 126
        %v746 = vpop.permute.xlu0 %745
        %747 = vrot.lane.b32.xlu0 %v726, 126
        %v748 = vpop.permute.xlu0 %747
        %749 = vrot.lane.b32.xlu0 %v727, 126
        %v750 = vpop.permute.xlu0 %749
        %751 = vrot.lane.b32.xlu0 %v728, 126
        %v752 = vpop.permute.xlu0 %751
        %v761 = vadd.f32 %v676, %v738
        %v762 = vadd.f32 %v677, %v740
        %v763 = vadd.f32 %v678, %v742
        %v764 = vadd.f32 %v679, %v744
        %v765 = vadd.f32 %v680, %v746
        %v766 = vadd.f32 %v681, %v748
        %v767 = vadd.f32 %v682, %v750
        %v768 = vadd.f32 %v683, %v752
        %v769 = vld [vmem:[#allocation2 + $0x2] sm:$0xff]
        %v770 = vld [vmem:[#allocation2 + $0xa] sm:$0xff]
        %v771 = vld [vmem:[#allocation2 + $0x1a] sm:$0xff]
        %v772 = vld [vmem:[#allocation2 + $0x22] sm:$0xff]
        %v773 = vld [vmem:[#allocation2 + $0x32] sm:$0xff]
        %v774 = vld [vmem:[#allocation2 + $0x3a] sm:$0xff]
        %v775 = vld [vmem:[#allocation2 + $0x4a] sm:$0xff]
        %v776 = vld [vmem:[#allocation2 + $0x52] sm:$0xff]
        %s777 = scalar_lea.vmem [#allocation7], 24
        %v778 = vld [vmem:[%s777] sm:$0x1]
        %v779 = vld [vmem:[%s777 + $0x1] sm:$0x1]
        %v780 = vld [vmem:[%s777 + $0x2] sm:$0x1]
        %v781 = vld [vmem:[%s777 + $0x3] sm:$0x1]
        %v786 = vlaneseq
        %v787 = vshrl.u32 %v786, 7
        %v788 = vsub.s32 0, %v787
        %v789 = vrot.slane %v778, %v788
        %v790 = vlaneseq
        %v791 = vshrl.u32 %v790, 7
        %v792 = vsub.s32 0, %v791
        %v793 = vrot.slane %v779, %v792
        %v794 = vlaneseq
        %v795 = vshrl.u32 %v794, 7
        %v796 = vsub.s32 0, %v795
        %v797 = vrot.slane %v780, %v796
        %v798 = vlaneseq
        %v799 = vshrl.u32 %v798, 7
        %v800 = vsub.s32 0, %v799
        %v801 = vrot.slane %v781, %v800
        %v806 = vmul.f32 %v769, %v789
        %v807 = vmul.f32 %v770, %v789
        %v808 = vmul.f32 %v771, %v793
        %v809 = vmul.f32 %v772, %v793
        %v810 = vmul.f32 %v773, %v797
        %v811 = vmul.f32 %v774, %v797
        %v812 = vmul.f32 %v775, %v801
        %v813 = vmul.f32 %v776, %v801
        %v814 = vadd.f32 %v761, %v806
        %v815 = vadd.f32 %v762, %v807
        %v816 = vadd.f32 %v763, %v808
        %v817 = vadd.f32 %v764, %v809
        %v818 = vadd.f32 %v765, %v810
        %v819 = vadd.f32 %v766, %v811
        %v820 = vadd.f32 %v767, %v812
        %v821 = vadd.f32 %v768, %v813
        %s822 = scalar_lea.vmem [#allocation7], 28
        %v823 = vld [vmem:[%s822] sm:$0x1]
        %v824 = vld [vmem:[%s822 + $0x1] sm:$0x1]
        %v825 = vld [vmem:[%s822 + $0x2] sm:$0x1]
        %v826 = vld [vmem:[%s822 + $0x3] sm:$0x1]
        %v831 = vlaneseq
        %v832 = vshrl.u32 %v831, 7
        %v833 = vsub.s32 0, %v832
        %v834 = vrot.slane %v823, %v833
        %v835 = vlaneseq
        %v836 = vshrl.u32 %v835, 7
        %v837 = vsub.s32 0, %v836
        %v838 = vrot.slane %v824, %v837
        %v839 = vlaneseq
        %v840 = vshrl.u32 %v839, 7
        %v841 = vsub.s32 0, %v840
        %v842 = vrot.slane %v825, %v841
        %v843 = vlaneseq
        %v844 = vshrl.u32 %v843, 7
        %v845 = vsub.s32 0, %v844
        %v846 = vrot.slane %v826, %v845
        %847 = vrot.lane.b32.xlu0 %v834, 1
        %v848 = vpop.permute.xlu0 %847
        %849 = vrot.lane.b32.xlu0 %v838, 1
        %v850 = vpop.permute.xlu0 %849
        %851 = vrot.lane.b32.xlu0 %v842, 1
        %v852 = vpop.permute.xlu0 %851
        %853 = vrot.lane.b32.xlu0 %v846, 1
        %v854 = vpop.permute.xlu0 %853
        %v859 = vmul.f32 %v769, %v848
        %v860 = vmul.f32 %v770, %v848
        %v861 = vmul.f32 %v771, %v850
        %v862 = vmul.f32 %v772, %v850
        %v863 = vmul.f32 %v773, %v852
        %v864 = vmul.f32 %v774, %v852
        %v865 = vmul.f32 %v775, %v854
        %v866 = vmul.f32 %v776, %v854
        %875 = vrot.lane.b32.xlu0 %v859, 127
        %v876 = vpop.permute.xlu0 %875
        %877 = vrot.lane.b32.xlu0 %v860, 127
        %v878 = vpop.permute.xlu0 %877
        %879 = vrot.lane.b32.xlu0 %v861, 127
        %v880 = vpop.permute.xlu0 %879
        %881 = vrot.lane.b32.xlu0 %v862, 127
        %v882 = vpop.permute.xlu0 %881
        %883 = vrot.lane.b32.xlu0 %v863, 127
        %v884 = vpop.permute.xlu0 %883
        %885 = vrot.lane.b32.xlu0 %v864, 127
        %v886 = vpop.permute.xlu0 %885
        %887 = vrot.lane.b32.xlu0 %v865, 127
        %v888 = vpop.permute.xlu0 %887
        %889 = vrot.lane.b32.xlu0 %v866, 127
        %v890 = vpop.permute.xlu0 %889
        %v899 = vadd.f32 %v814, %v876
        %v900 = vadd.f32 %v815, %v878
        %v901 = vadd.f32 %v816, %v880
        %v902 = vadd.f32 %v817, %v882
        %v903 = vadd.f32 %v818, %v884
        %v904 = vadd.f32 %v819, %v886
        %v905 = vadd.f32 %v820, %v888
        %v906 = vadd.f32 %v821, %v890
        %s907 = scalar_lea.vmem [#allocation7], 32
        %v908 = vld [vmem:[%s907] sm:$0x1]
        %v909 = vld [vmem:[%s907 + $0x1] sm:$0x1]
        %v910 = vld [vmem:[%s907 + $0x2] sm:$0x1]
        %v911 = vld [vmem:[%s907 + $0x3] sm:$0x1]
        %v916 = vlaneseq
        %v917 = vshrl.u32 %v916, 7
        %v918 = vsub.s32 0, %v917
        %v919 = vrot.slane %v908, %v918
        %v920 = vlaneseq
        %v921 = vshrl.u32 %v920, 7
        %v922 = vsub.s32 0, %v921
        %v923 = vrot.slane %v909, %v922
        %v924 = vlaneseq
        %v925 = vshrl.u32 %v924, 7
        %v926 = vsub.s32 0, %v925
        %v927 = vrot.slane %v910, %v926
        %v928 = vlaneseq
        %v929 = vshrl.u32 %v928, 7
        %v930 = vsub.s32 0, %v929
        %v931 = vrot.slane %v911, %v930
        %932 = vrot.lane.b32.xlu0 %v919, 2
        %v933 = vpop.permute.xlu0 %932
        %934 = vrot.lane.b32.xlu0 %v923, 2
        %v935 = vpop.permute.xlu0 %934
        %936 = vrot.lane.b32.xlu0 %v927, 2
        %v937 = vpop.permute.xlu0 %936
        %938 = vrot.lane.b32.xlu0 %v931, 2
        %v939 = vpop.permute.xlu0 %938
        %v944 = vmul.f32 %v769, %v933
        %v945 = vmul.f32 %v770, %v933
        %v946 = vmul.f32 %v771, %v935
        %v947 = vmul.f32 %v772, %v935
        %v948 = vmul.f32 %v773, %v937
        %v949 = vmul.f32 %v774, %v937
        %v950 = vmul.f32 %v775, %v939
        %v951 = vmul.f32 %v776, %v939
        %960 = vrot.lane.b32.xlu0 %v944, 126
        %v961 = vpop.permute.xlu0 %960
        %962 = vrot.lane.b32.xlu0 %v945, 126
        %v963 = vpop.permute.xlu0 %962
        %964 = vrot.lane.b32.xlu0 %v946, 126
        %v965 = vpop.permute.xlu0 %964
        %966 = vrot.lane.b32.xlu0 %v947, 126
        %v967 = vpop.permute.xlu0 %966
        %968 = vrot.lane.b32.xlu0 %v948, 126
        %v969 = vpop.permute.xlu0 %968
        %970 = vrot.lane.b32.xlu0 %v949, 126
        %v971 = vpop.permute.xlu0 %970
        %972 = vrot.lane.b32.xlu0 %v950, 126
        %v973 = vpop.permute.xlu0 %972
        %974 = vrot.lane.b32.xlu0 %v951, 126
        %v975 = vpop.permute.xlu0 %974
        %v984 = vadd.f32 %v899, %v961
        %v985 = vadd.f32 %v900, %v963
        %v986 = vadd.f32 %v901, %v965
        %v987 = vadd.f32 %v902, %v967
        %v988 = vadd.f32 %v903, %v969
        %v989 = vadd.f32 %v904, %v971
        %v990 = vadd.f32 %v905, %v973
        %v991 = vadd.f32 %v906, %v975
        %v996 = vrot.slane %v986, 7
        %vm997 = vcmask 1041409
        %v998 = vsel %vm997, %v996, %v984
        %vm999 = vcmask 1045509
        %v1000 = vsel %vm999, %v996, %v998
        %v1001 = vrot.slane %v988, 6
        %vm1002 = vcmask 1042434
        %v1003 = vsel %vm1002, %v1001, %v1000
        %vm1004 = vcmask 1046534
        %v1005 = vsel %vm1004, %v1001, %v1003
        %v1006 = vrot.slane %v990, 5
        %vm1007 = vcmask 1043459
        %v1008 = vsel %vm1007, %v1006, %v1005
        %vm1009 = vcmask 1047559
        %v1010 = vsel %vm1009, %v1006, %v1008
        %vm1012 = vcmask 125952
        %1013 = vst.msk [vmem:[#allocation3] sm:$0xf] %vm1012, %v1010
        %v1014 = vrot.slane %v984, 1
        %v1015 = vsel %vm997, %v986, %v1014
        %v1016 = vsel %vm999, %v986, %v1015
        %v1017 = vrot.slane %v988, 7
        %v1018 = vsel %vm1002, %v1017, %v1016
        %v1019 = vsel %vm1004, %v1017, %v1018
        %v1020 = vrot.slane %v990, 6
        %v1021 = vsel %vm1007, %v1020, %v1019
        %v1022 = vsel %vm1009, %v1020, %v1021
        %1023 = vrot.lane.b32.xlu0 %v1022, 16
        %v1024 = vpop.permute.xlu0 %1023
        %vm1026 = vcmask 257152
        %1027 = vst.msk [vmem:[#allocation3] sm:$0xf] %vm1026, %v1024
        %v1028 = vrot.slane %v984, 2
        %v1029 = vrot.slane %v986, 1
        %v1030 = vsel %vm997, %v1029, %v1028
        %v1031 = vsel %vm999, %v1029, %v1030
        %v1032 = vsel %vm1002, %v988, %v1031
        %v1033 = vsel %vm1004, %v988, %v1032
        %v1034 = vrot.slane %v990, 7
        %v1035 = vsel %vm1007, %v1034, %v1033
        %v1036 = vsel %vm1009, %v1034, %v1035
        %1037 = vrot.lane.b32.xlu0 %v1036, 32
        %v1038 = vpop.permute.xlu0 %1037
        %vm1040 = vcmask 388352
        %1041 = vst.msk [vmem:[#allocation3] sm:$0xf] %vm1040, %v1038
        %v1042 = vrot.slane %v984, 3
        %v1043 = vrot.slane %v986, 2
        %v1044 = vsel %vm997, %v1043, %v1042
        %v1045 = vsel %vm999, %v1043, %v1044
        %v1046 = vrot.slane %v988, 1
        %v1047 = vsel %vm1002, %v1046, %v1045
        %v1048 = vsel %vm1004, %v1046, %v1047
        %v1049 = vsel %vm1007, %v990, %v1048
        %v1050 = vsel %vm1009, %v990, %v1049
        %1051 = vrot.lane.b32.xlu0 %v1050, 48
        %v1052 = vpop.permute.xlu0 %1051
        %vm1054 = vcmask 519552
        %1055 = vst.msk [vmem:[#allocation3] sm:$0xf] %vm1054, %v1052
        %v1056 = vcombine.high %v984, %v984
        %v1057 = vcombine.high %v986, %v986
        %v1058 = vcombine.high %v988, %v988
        %v1059 = vcombine.high %v990, %v990
        %v1060 = vrot.slane %v1057, 7
        %v1061 = vsel %vm997, %v1060, %v1056
        %v1062 = vsel %vm999, %v1060, %v1061
        %v1063 = vrot.slane %v1058, 6
        %v1064 = vsel %vm1002, %v1063, %v1062
        %v1065 = vsel %vm1004, %v1063, %v1064
        %v1066 = vrot.slane %v1059, 5
        %v1067 = vsel %vm1007, %v1066, %v1065
        %v1068 = vsel %vm1009, %v1066, %v1067
        %1069 = vrot.lane.b32.xlu0 %v1068, 64
        %v1070 = vpop.permute.xlu0 %1069
        %vm1072 = vcmask 650752
        %1073 = vst.msk [vmem:[#allocation3] sm:$0xf] %vm1072, %v1070
        %v1074 = vrot.slane %v1056, 1
        %v1075 = vsel %vm997, %v1057, %v1074
        %v1076 = vsel %vm999, %v1057, %v1075
        %v1077 = vrot.slane %v1058, 7
        %v1078 = vsel %vm1002, %v1077, %v1076
        %v1079 = vsel %vm1004, %v1077, %v1078
        %v1080 = vrot.slane %v1059, 6
        %v1081 = vsel %vm1007, %v1080, %v1079
        %v1082 = vsel %vm1009, %v1080, %v1081
        %1083 = vrot.lane.b32.xlu0 %v1082, 80
        %v1084 = vpop.permute.xlu0 %1083
        %vm1086 = vcmask 781952
        %1087 = vst.msk [vmem:[#allocation3] sm:$0xf] %vm1086, %v1084
        %v1088 = vrot.slane %v1056, 2
        %v1089 = vrot.slane %v1057, 1
        %v1090 = vsel %vm997, %v1089, %v1088
        %v1091 = vsel %vm999, %v1089, %v1090
        %v1092 = vsel %vm1002, %v1058, %v1091
        %v1093 = vsel %vm1004, %v1058, %v1092
        %v1094 = vrot.slane %v1059, 7
        %v1095 = vsel %vm1007, %v1094, %v1093
        %v1096 = vsel %vm1009, %v1094, %v1095
        %1097 = vrot.lane.b32.xlu0 %v1096, 96
        %v1098 = vpop.permute.xlu0 %1097
        %vm1100 = vcmask 913152
        %1101 = vst.msk [vmem:[#allocation3] sm:$0xf] %vm1100, %v1098
        %v1102 = vrot.slane %v1056, 3
        %v1103 = vrot.slane %v1057, 2
        %v1104 = vsel %vm997, %v1103, %v1102
        %v1105 = vsel %vm999, %v1103, %v1104
        %v1106 = vrot.slane %v1058, 1
        %v1107 = vsel %vm1002, %v1106, %v1105
        %v1108 = vsel %vm1004, %v1106, %v1107
        %v1109 = vsel %vm1007, %v1059, %v1108
        %v1110 = vsel %vm1009, %v1059, %v1109
        %1111 = vrot.lane.b32.xlu0 %v1110, 112
        %v1112 = vpop.permute.xlu0 %1111
        %vm1114 = vcmask 1044352
        %1115 = vst.msk [vmem:[#allocation3] sm:$0xf] %vm1114, %v1112
        %v1120 = vrot.slane %v987, 7
        %v1121 = vsel %vm997, %v1120, %v985
        %v1122 = vsel %vm999, %v1120, %v1121
        %v1123 = vrot.slane %v989, 6
        %v1124 = vsel %vm1002, %v1123, %v1122
        %v1125 = vsel %vm1004, %v1123, %v1124
        %v1126 = vrot.slane %v991, 5
        %v1127 = vsel %vm1007, %v1126, %v1125
        %v1128 = vsel %vm1009, %v1126, %v1127
        %1130 = vst.msk [vmem:[#allocation3 + $0x4] sm:$0xf] %vm1012, %v1128
        %v1131 = vrot.slane %v985, 1
        %v1132 = vsel %vm997, %v987, %v1131
        %v1133 = vsel %vm999, %v987, %v1132
        %v1134 = vrot.slane %v989, 7
        %v1135 = vsel %vm1002, %v1134, %v1133
        %v1136 = vsel %vm1004, %v1134, %v1135
        %v1137 = vrot.slane %v991, 6
        %v1138 = vsel %vm1007, %v1137, %v1136
        %v1139 = vsel %vm1009, %v1137, %v1138
        %1140 = vrot.lane.b32.xlu0 %v1139, 16
        %v1141 = vpop.permute.xlu0 %1140
        %1143 = vst.msk [vmem:[#allocation3 + $0x4] sm:$0xf] %vm1026, %v1141
        %v1144 = vrot.slane %v985, 2
        %v1145 = vrot.slane %v987, 1
        %v1146 = vsel %vm997, %v1145, %v1144
        %v1147 = vsel %vm999, %v1145, %v1146
        %v1148 = vsel %vm1002, %v989, %v1147
        %v1149 = vsel %vm1004, %v989, %v1148
        %v1150 = vrot.slane %v991, 7
        %v1151 = vsel %vm1007, %v1150, %v1149
        %v1152 = vsel %vm1009, %v1150, %v1151
        %1153 = vrot.lane.b32.xlu0 %v1152, 32
        %v1154 = vpop.permute.xlu0 %1153
        %1156 = vst.msk [vmem:[#allocation3 + $0x4] sm:$0xf] %vm1040, %v1154
        %v1157 = vrot.slane %v985, 3
        %v1158 = vrot.slane %v987, 2
        %v1159 = vsel %vm997, %v1158, %v1157
        %v1160 = vsel %vm999, %v1158, %v1159
        %v1161 = vrot.slane %v989, 1
        %v1162 = vsel %vm1002, %v1161, %v1160
        %v1163 = vsel %vm1004, %v1161, %v1162
        %v1164 = vsel %vm1007, %v991, %v1163
        %v1165 = vsel %vm1009, %v991, %v1164
        %1166 = vrot.lane.b32.xlu0 %v1165, 48
        %v1167 = vpop.permute.xlu0 %1166
        %1169 = vst.msk [vmem:[#allocation3 + $0x4] sm:$0xf] %vm1054, %v1167
        %v1170 = vcombine.high %v985, %v985
        %v1171 = vcombine.high %v987, %v987
        %v1172 = vcombine.high %v989, %v989
        %v1173 = vcombine.high %v991, %v991
        %v1174 = vrot.slane %v1171, 7
        %v1175 = vsel %vm997, %v1174, %v1170
        %v1176 = vsel %vm999, %v1174, %v1175
        %v1177 = vrot.slane %v1172, 6
        %v1178 = vsel %vm1002, %v1177, %v1176
        %v1179 = vsel %vm1004, %v1177, %v1178
        %v1180 = vrot.slane %v1173, 5
        %v1181 = vsel %vm1007, %v1180, %v1179
        %v1182 = vsel %vm1009, %v1180, %v1181
        %1183 = vrot.lane.b32.xlu0 %v1182, 64
        %v1184 = vpop.permute.xlu0 %1183
        %1186 = vst.msk [vmem:[#allocation3 + $0x4] sm:$0xf] %vm1072, %v1184
        %v1187 = vrot.slane %v1170, 1
        %v1188 = vsel %vm997, %v1171, %v1187
        %v1189 = vsel %vm999, %v1171, %v1188
        %v1190 = vrot.slane %v1172, 7
        %v1191 = vsel %vm1002, %v1190, %v1189
        %v1192 = vsel %vm1004, %v1190, %v1191
        %v1193 = vrot.slane %v1173, 6
        %v1194 = vsel %vm1007, %v1193, %v1192
        %v1195 = vsel %vm1009, %v1193, %v1194
        %1196 = vrot.lane.b32.xlu0 %v1195, 80
        %v1197 = vpop.permute.xlu0 %1196
        %1199 = vst.msk [vmem:[#allocation3 + $0x4] sm:$0xf] %vm1086, %v1197
        %v1200 = vrot.slane %v1170, 2
        %v1201 = vrot.slane %v1171, 1
        %v1202 = vsel %vm997, %v1201, %v1200
        %v1203 = vsel %vm999, %v1201, %v1202
        %v1204 = vsel %vm1002, %v1172, %v1203
        %v1205 = vsel %vm1004, %v1172, %v1204
        %v1206 = vrot.slane %v1173, 7
        %v1207 = vsel %vm1007, %v1206, %v1205
        %v1208 = vsel %vm1009, %v1206, %v1207
        %1209 = vrot.lane.b32.xlu0 %v1208, 96
        %v1210 = vpop.permute.xlu0 %1209
        %1212 = vst.msk [vmem:[#allocation3 + $0x4] sm:$0xf] %vm1100, %v1210
        %v1213 = vrot.slane %v1170, 3
        %v1214 = vrot.slane %v1171, 2
        %v1215 = vsel %vm997, %v1214, %v1213
        %v1216 = vsel %vm999, %v1214, %v1215
        %v1217 = vrot.slane %v1172, 1
        %v1218 = vsel %vm1002, %v1217, %v1216
        %v1219 = vsel %vm1004, %v1217, %v1218
        %v1220 = vsel %vm1007, %v1173, %v1219
        %v1221 = vsel %vm1009, %v1173, %v1220
        %1222 = vrot.lane.b32.xlu0 %v1221, 112
        %v1223 = vpop.permute.xlu0 %1222
        %1225 = vst.msk [vmem:[#allocation3 + $0x4] sm:$0xf] %vm1114, %v1223
        %v1226 = vld [vmem:[#allocation3] sm:$0xff]
        %1228 = vset.pattern.permute.xlu0 0
        %1229 = vperm.xlu0 %1228, %v321
        %v1230 = vpop.permute.xlu0 %1229
        %v1232 = vunpack.c.l.s4 839922192
        %v1233 = vunpack.c.0.s8 %v1232
        %v1234 = vlaneseq
        %v1235 = vshrl.u32 %v1234, 7
        %v1236 = vsub.s32 %v1233, %v1235
        %v1237 = vrot.slane %v1230, %v1236
        %v1239 = vadd.f32 %v1226, %v1237
        %v1240 = vmax.f32 %v1239, 0.0
        %1242 = vset.pattern.permute.xlu0 0
        %1243 = vperm.xlu0 %1242, %v322
        %v1244 = vpop.permute.xlu0 %1243
        %v1247 = vlaneseq
        %v1248 = vshrl.u32 %v1247, 7
        %v1249 = vsub.s32 0, %v1248
        %v1250 = vrot.slane %v1240, %v1249
        %v1251 = vlaneseq
        %v1252 = vshrl.u32 %v1251, 7
        %v1253 = vsub.s32 4, %v1252
        %v1254 = vrot.slane %v1240, %v1253
        %v1257 = vlaneseq
        %v1258 = vshrl.u32 %v1257, 7
        %v1259 = vsub.s32 0, %v1258
        %v1260 = vrot.slane %v1250, %v1259
        %v1261 = vlaneseq
        %v1262 = vshrl.u32 %v1261, 7
        %v1263 = vsub.s32 0, %v1262
        %v1264 = vrot.slane %v1254, %v1263
        %v1265 = vmul.f32 %v1244, %v1260
        %v1266 = vmul.f32 %v1244, %v1264
        %v1267 = vadd.f32 %v1265, 0.0
        %v1268 = vadd.f32 %v1266, 0.0
        %1269 = vset.pattern.permute.xlu0 1
        %1270 = vperm.xlu0 %1269, %v322
        %v1271 = vpop.permute.xlu0 %1270
        %v1273 = vlaneseq
        %v1274 = vshrl.u32 %v1273, 7
        %v1275 = vsub.s32 1, %v1274
        %v1276 = vrot.slane %v1240, %v1275
        %v1277 = vlaneseq
        %v1278 = vshrl.u32 %v1277, 7
        %v1279 = vsub.s32 5, %v1278
        %v1280 = vrot.slane %v1240, %v1279
        %v1283 = vlaneseq
        %v1284 = vshrl.u32 %v1283, 7
        %v1285 = vsub.s32 1, %v1284
        %v1286 = vrot.slane %v1276, %v1285
        %v1287 = vlaneseq
        %v1288 = vshrl.u32 %v1287, 7
        %v1289 = vsub.s32 1, %v1288
        %v1290 = vrot.slane %v1280, %v1289
        %v1291 = vmul.f32 %v1271, %v1286
        %v1292 = vmul.f32 %v1271, %v1290
        %v1293 = vadd.f32 %v1267, %v1291
        %v1294 = vadd.f32 %v1268, %v1292
        %1295 = vset.pattern.permute.xlu0 2
        %1296 = vperm.xlu0 %1295, %v322
        %v1297 = vpop.permute.xlu0 %1296
        %v1299 = vlaneseq
        %v1300 = vshrl.u32 %v1299, 7
        %v1301 = vsub.s32 2, %v1300
        %v1302 = vrot.slane %v1240, %v1301
        %v1303 = vlaneseq
        %v1304 = vshrl.u32 %v1303, 7
        %v1305 = vsub.s32 6, %v1304
        %v1306 = vrot.slane %v1240, %v1305
        %v1309 = vlaneseq
        %v1310 = vshrl.u32 %v1309, 7
        %v1311 = vsub.s32 2, %v1310
        %v1312 = vrot.slane %v1302, %v1311
        %v1313 = vlaneseq
        %v1314 = vshrl.u32 %v1313, 7
        %v1315 = vsub.s32 2, %v1314
        %v1316 = vrot.slane %v1306, %v1315
        %v1317 = vmul.f32 %v1297, %v1312
        %v1318 = vmul.f32 %v1297, %v1316
        %v1319 = vadd.f32 %v1293, %v1317
        %v1320 = vadd.f32 %v1294, %v1318
        %1321 = vset.pattern.permute.xlu0 3
        %1322 = vperm.xlu0 %1321, %v322
        %v1323 = vpop.permute.xlu0 %1322
        %v1325 = vlaneseq
        %v1326 = vshrl.u32 %v1325, 7
        %v1327 = vsub.s32 3, %v1326
        %v1328 = vrot.slane %v1240, %v1327
        %v1329 = vlaneseq
        %v1330 = vshrl.u32 %v1329, 7
        %v1331 = vsub.s32 7, %v1330
        %v1332 = vrot.slane %v1240, %v1331
        %v1335 = vlaneseq
        %v1336 = vshrl.u32 %v1335, 7
        %v1337 = vsub.s32 3, %v1336
        %v1338 = vrot.slane %v1328, %v1337
        %v1339 = vlaneseq
        %v1340 = vshrl.u32 %v1339, 7
        %v1341 = vsub.s32 3, %v1340
        %v1342 = vrot.slane %v1332, %v1341
        %v1343 = vmul.f32 %v1323, %v1338
        %v1344 = vmul.f32 %v1323, %v1342
        %v1345 = vadd.f32 %v1319, %v1343
        %v1346 = vadd.f32 %v1320, %v1344
        %1348 = vset.pattern.permute.xlu0 0
        %1349 = vperm.xlu0 %1348, %v323
        %v1350 = vpop.permute.xlu0 %1349
        %v1352 = vadd.f32 %v1345, %v1350
        %v1353 = vadd.f32 %v1346, %v1350
        %v1354 = vmax.f32 %v1352, 0.0
        %v1355 = vmax.f32 %v1353, 0.0
        %1356 = vst [vmem:[%s257] sm:$0xff] %v1354
        %1357 = vst [vmem:[%s257 + $0x8] sm:$0xff] %v1355
        %s1358 = sand.u32 %s141, 1
        %s1359 = scalar_lea.sflag [#allocation6], %s1358
        %s1360 = sand.u32 %s141, 1
        %s1361 = smul.addr %s1360, 16
        %s1362 = scalar_lea.vmem [#allocation9], %s1361
        // Predicated region
        $region49: #{tpu_custom_call.1} parent=39 // pred_check
          %p1363 = pneg %p151
        $region50: #{tpu_custom_call.1} parent=39 // pred_check_branch
          %1365 = sbr.rel (%p1363) target = $region52
        $region51: #{tpu_custom_call.1} parent=39 // pred_region
          %s1367 = ssub.s32 256, 256
          %1368 = vsyncadd %s1359, %s1367
          %s1369 = smul.addr %s23, 2
          %s1370 = smul.addr %s1369, 128
          %s1371 = scalar_lea.hbm %s5, %s1370
          %s1373 = sshll.u32 %s1362, 4
          %s1374 = int_to_ptr.vmem [resolvable:$true] %s1373
          %1376 = dma.vmem_to_hbm [thread:$0]  %s1374, 256, %s1371, %s1359
        $region52: #{tpu_custom_call.1} parent=39 // pred_fallthru
          _
      $region40: #{tpu_custom_call.1} parent=5 // pred_fallthru
        _
      %p1377 = scmp.le.s32.totalorder 2, %s18
      // Predicated region
      $region53: #{tpu_custom_call.1} parent=5 // pred_check
        %p1378 = pneg %p1377
      $region54: #{tpu_custom_call.1} parent=5 // pred_check_branch
        %1380 = sbr.rel (%p1378) target = $region56
      $region55: #{tpu_custom_call.1} parent=5 // pred_region
        %s1381 = ssub.s32 %s18, 2
        // Predicated region
        $region57: #{tpu_custom_call.1} parent=55 // pred_check
          %p1382 = pneg %p157
        $region58: #{tpu_custom_call.1} parent=55 // pred_check_branch
          %1384 = sbr.rel (%p1382) target = $region60
        $region59: #{tpu_custom_call.1} parent=55 // pred_region
          %s1385 = sand.u32 %s142, 1
          %s1386 = scalar_lea.sflag [#allocation6], %s1385
          %s1387 = sand.u32 %s142, 1
          %s1388 = smul.addr %s1387, 16
          %s1389 = scalar_lea.vmem [#allocation9], %s1388
          %1390 = dma.done %s1386, 256
        $region60: #{tpu_custom_call.1} parent=55 // pred_fallthru
          _
      $region56: #{tpu_custom_call.1} parent=5 // pred_fallthru
        _
    $region6: #{tpu_custom_call.1} parent=1 // loop_footer
      %s22 = sadd.s32 1, %s18
    $region7: #{tpu_custom_call.1} parent=1 // loop_footer_branch
      %17 = sbr.rel target = $region3
    $region8: #{tpu_custom_call.1} parent=1 // loop_exit
      _
    %1391 = vsyncpa [#allocation5], 1
    %s1392 = scalar_lea.sflag [#allocation5], 1
    %1393 = vsyncpa %s1392, 1
    %1394 = vsyncpa [#allocation8], 1
    %1395 = vsyncpa [#allocation6], 1
    %s1396 = scalar_lea.sflag [#allocation6], 1
    %1397 = vsyncpa %s1396, 1

</llo_original>
